<compile_context>
chip_gen: v5e
topology: v5e:2x2
jax: 0.10.0
libtpu: 0.0.40
codegen_flags: <defaults>
</compile_context>

<pallas_src>
import jax
import jax.numpy as jnp
from jax.experimental import pallas as pl
from jax.experimental.pallas import tpu as pltpu


def dnn_kernel(x_ref, w1_ref, b1_ref, w2_ref, b2_ref, o_ref):
    # In-kernel cast to bf16: free on the VPU, halves the matmul operand width.
    x_bf = x_ref[...].astype(jnp.bfloat16)
    # (TM, 3072) bf16 @ (3072, 256) bf16 -> f32 accumulate on the MXU.
    h = jnp.dot(x_bf, w1_ref[...], preferred_element_type=jnp.float32)
    h = jnp.maximum(h + b1_ref[...], 0.0)                  # bias + ReLU in f32
    # (TM, 256) bf16 @ (256, 128) bf16 -> f32 (lane-dense, zero-padded cols).
    y = jnp.dot(h.astype(jnp.bfloat16), w2_ref[...],
                preferred_element_type=jnp.float32)
    o_ref[...] = (y + b2_ref[...]).astype(o_ref.dtype)


def prepare_params(w1, b1, w2, b2):
    """One-time parameter prep (hoisted off the per-call hot path).

    Weights are stored transposed as (in, out) -- i.e. torch W.T -- so the
    kernel computes x @ W + b, matching nn.Linear.  w2/b2 are zero-padded to
    128 output lanes so the kernel's stores are full-vreg (lane-dense).
    """
    d_in, d_hidden = w1.shape
    d_out = w2.shape[1]
    d_out_pad = max(128, ((d_out + 127) // 128) * 128)

    w1_bf = w1.astype(jnp.bfloat16)
    w2_bf = jnp.zeros((d_hidden, d_out_pad), jnp.bfloat16)
    w2_bf = w2_bf.at[:, :d_out].set(w2.astype(jnp.bfloat16))
    b1_2d = b1.reshape(1, d_hidden).astype(jnp.float32)
    b2_2d = jnp.zeros((1, d_out_pad), jnp.float32).at[0, :d_out].set(b2)
    return (w1_bf, b1_2d, w2_bf, b2_2d, d_out)


def dnn_forward(x_nchw, params, *, tm=512):
    """x_nchw: (B, C, H, W) float32.  Returns (B, 10) float32 logits."""
    w1_bf, b1_2d, w2_bf, b2_2d, d_out = params
    B = x_nchw.shape[0]
    d_in = x_nchw.shape[1] * x_nchw.shape[-2] * x_nchw.shape[-1]
    x2d = x_nchw.reshape(B, d_in)                # torch .view; no pad, no cast
    d_hidden = w1_bf.shape[1]
    d_out_pad = w2_bf.shape[1]

    # Batch tile: round small B up to the 8-row sublane granule, cap at `tm`
    # (512 default; keeps TM*3072*f32 double-buffered well under v7x's 64 MiB).
    TM = min(tm, max(8, ((B + 7) // 8) * 8))
    # v7x has 2 TensorCores: make sure the (parallel) grid has >= 2 steps when
    # there is enough work, otherwise one core would sit idle.
    if B >= 16 and pl.cdiv(B, TM) < 2:
        TM = max(8, ((pl.cdiv(B, 2) + 7) // 8) * 8)
    grid = (pl.cdiv(B, TM),)

    flops = 2 * B * (d_in * d_hidden + d_hidden * d_out_pad)
    bytes_accessed = (B * d_in * 4                      # x read once, f32
                      + w1_bf.size * 2 + w2_bf.size * 2  # bf16 weights
                      + b1_2d.size * 4 + b2_2d.size * 4  # f32 biases
                      + B * d_out_pad * 4)               # f32 padded logits

    out = pl.pallas_call(
        dnn_kernel,
        out_shape=jax.ShapeDtypeStruct((B, d_out_pad), jnp.float32),
        grid=grid,
        in_specs=[
            pl.BlockSpec((TM, d_in), lambda i: (i, 0)),            # x (tiled)
            pl.BlockSpec((d_in, d_hidden), lambda i: (0, 0)),      # w1 resident
            pl.BlockSpec((1, d_hidden), lambda i: (0, 0)),         # b1 resident
            pl.BlockSpec((d_hidden, d_out_pad), lambda i: (0, 0)),  # w2 resident
            pl.BlockSpec((1, d_out_pad), lambda i: (0, 0)),        # b2 resident
        ],
        out_specs=pl.BlockSpec((TM, d_out_pad), lambda i: (i, 0)),
        compiler_params=pltpu.CompilerParams(
            dimension_semantics=("parallel",),   # dual-TC sharding on v7x
            vmem_limit_bytes=32 << 20,           # ~16 MiB actual use at TM=512
        ),
        cost_estimate=pl.CostEstimate(
            flops=flops, transcendentals=0, bytes_accessed=bytes_accessed),
    )(x2d, w1_bf, b1_2d, w2_bf, b2_2d)

    # Drop the zero-padded logit columns (lane-dense slab -> (B, 10)).
    return out[:, :d_out]


def init_params(key, dim_in=3 * 32 * 32, dim_hidden=256, dim_out=10):
    """PyTorch nn.Linear default init (uniform +/- 1/sqrt(fan_in)).
    Weights stored as (in, out) -- torch W.T -- so the kernel does x @ W."""
    k1, k2, k3, k4 = jax.random.split(key, 4)
    bound1 = 1.0 / jnp.sqrt(dim_in)
    bound2 = 1.0 / jnp.sqrt(dim_hidden)
    w1 = jax.random.uniform(k1, (dim_in, dim_hidden), jnp.float32, -bound1, bound1)
    b1 = jax.random.uniform(k2, (dim_hidden,), jnp.float32, -bound1, bound1)
    w2 = jax.random.uniform(k3, (dim_hidden, dim_out), jnp.float32, -bound2, bound2)
    b2 = jax.random.uniform(k4, (dim_out,), jnp.float32, -bound2, bound2)
    return w1, b1, w2, b2


if __name__ == "__main__":
    key = jax.random.PRNGKey(0)
    kp, kx = jax.random.split(key)

    # The module hard-codes Linear(3*32*32, 256), so input must flatten to 3072.
    B, C, H, W = 2, 3, 32, 32
    x = jax.random.normal(kx, (B, C, H, W), jnp.float32)

    w1, b1, w2, b2 = init_params(kp)
    params = prepare_params(w1, b1, w2, b2)   # one-time prep, off the hot path

    out = dnn_forward(x, params)
    jax.block_until_ready(out)

    # Reference using the same bf16-rounded matmul operands (f32 accumulate).
    x2d = x.reshape(B, -1)
    xb = x2d.astype(jnp.bfloat16).astype(jnp.float32)
    w1b = w1.astype(jnp.bfloat16).astype(jnp.float32)
    w2b = w2.astype(jnp.bfloat16).astype(jnp.float32)
    h = jnp.maximum(xb @ w1b + b1, 0.0)
    ref = h.astype(jnp.bfloat16).astype(jnp.float32) @ w2b + b2

    assert out.shape == (B, 10)
    assert jnp.allclose(out, ref, atol=1e-2, rtol=1e-2)

    print("KERNEL_OK")
</pallas_src>

<mosaic_0001>
module attributes {stable_mosaic.version = 11 : i64} {
  func.func @dnn_kernel(%arg0: i32, %arg1: memref<8x3072xf32, #tpu.memory_space<vmem>>, %arg2: memref<3072x256xbf16, #tpu.memory_space<vmem>>, %arg3: memref<1x256xf32, #tpu.memory_space<vmem>>, %arg4: memref<256x128xbf16, #tpu.memory_space<vmem>>, %arg5: memref<1x128xf32, #tpu.memory_space<vmem>>, %arg6: memref<8x128xf32, #tpu.memory_space<vmem>>) attributes {dimension_semantics = [#tpu.dimension_semantics<parallel>], iteration_bounds = array<i64: 1>, scalar_prefetch = 0 : i64, scratch_operands = 0 : i64, tpu.core_type = #tpu.core_type<tc>, window_params = [{transform_indices = @transform_0, window_bounds = array<i64: 8, 3072>}, {pipeline_mode = #tpu.pipeline_mode<synchronous>, transform_indices = @transform_1, window_bounds = array<i64: 3072, 256>}, {pipeline_mode = #tpu.pipeline_mode<synchronous>, transform_indices = @transform_2, window_bounds = array<i64: 1, 256>}, {pipeline_mode = #tpu.pipeline_mode<synchronous>, transform_indices = @transform_3, window_bounds = array<i64: 256, 128>}, {pipeline_mode = #tpu.pipeline_mode<synchronous>, transform_indices = @transform_4, window_bounds = array<i64: 1, 128>}, {transform_indices = @transform_5, window_bounds = array<i64: 8, 128>}]} {
    %c0 = arith.constant 0 : index
    %c0_0 = arith.constant 0 : index
    %0 = vector.load %arg1[%c0, %c0_0] : memref<8x3072xf32, #tpu.memory_space<vmem>>, vector<8x3072xf32>
    %1 = arith.truncf %0 : vector<8x3072xf32> to vector<8x3072xbf16>
    %c0_1 = arith.constant 0 : index
    %c0_2 = arith.constant 0 : index
    %2 = vector.load %arg2[%c0_1, %c0_2] : memref<3072x256xbf16, #tpu.memory_space<vmem>>, vector<3072x256xbf16>
    %cst = arith.constant dense<0.000000e+00> : vector<8x256xf32>
    %3 = tpu.matmul %1, %2, %cst {dimension_numbers = #tpu.dot_dimension_numbers<[1], [0], [0], [1], [0, 0, 1, 1], [], []>} : vector<8x3072xbf16>, vector<3072x256xbf16>, vector<8x256xf32> -> vector<8x256xf32>
    %c0_3 = arith.constant 0 : index
    %c0_4 = arith.constant 0 : index
    %4 = vector.load %arg3[%c0_3, %c0_4] : memref<1x256xf32, #tpu.memory_space<vmem>>, vector<1x256xf32>
    %5 = vector.broadcast %4 : vector<1x256xf32> to vector<8x256xf32>
    %6 = arith.addf %3, %5 : vector<8x256xf32>
    %cst_5 = arith.constant 0.000000e+00 : f32
    %7 = vector.broadcast %cst_5 : f32 to vector<8x256xf32>
    %8 = arith.maximumf %6, %7 : vector<8x256xf32>
    %9 = arith.truncf %8 : vector<8x256xf32> to vector<8x256xbf16>
    %c0_6 = arith.constant 0 : index
    %c0_7 = arith.constant 0 : index
    %10 = vector.load %arg4[%c0_6, %c0_7] : memref<256x128xbf16, #tpu.memory_space<vmem>>, vector<256x128xbf16>
    %cst_8 = arith.constant dense<0.000000e+00> : vector<8x128xf32>
    %11 = tpu.matmul %9, %10, %cst_8 {dimension_numbers = #tpu.dot_dimension_numbers<[1], [0], [0], [1], [0, 0, 1, 1], [], []>} : vector<8x256xbf16>, vector<256x128xbf16>, vector<8x128xf32> -> vector<8x128xf32>
    %c0_9 = arith.constant 0 : index
    %c0_10 = arith.constant 0 : index
    %12 = vector.load %arg5[%c0_9, %c0_10] : memref<1x128xf32, #tpu.memory_space<vmem>>, vector<1x128xf32>
    %13 = vector.broadcast %12 : vector<1x128xf32> to vector<8x128xf32>
    %14 = arith.addf %11, %13 : vector<8x128xf32>
    %c0_11 = arith.constant 0 : index
    %c0_12 = arith.constant 0 : index
    %15 = vector.load %arg6[%c0_11, %c0_12] : memref<8x128xf32, #tpu.memory_space<vmem>>, vector<8x128xf32>
    tpu.vector_store %arg6[%c0_11, %c0_12], %14 {strides = array<i32>} : memref<8x128xf32, #tpu.memory_space<vmem>>, vector<8x128xf32>,
    return
  }
  func.func @transform_0(%arg0: i32) -> (i32, i32) {
    %c0_i32 = arith.constant 0 : i32
    %c0_i32_0 = arith.constant 0 : i32
    return %arg0, %c0_i32 : i32, i32
  }
  func.func @transform_1(%arg0: i32) -> (i32, i32) {
    %c0_i32 = arith.constant 0 : i32
    %c0_i32_0 = arith.constant 0 : i32
    %c0_i32_1 = arith.constant 0 : i32
    return %c0_i32, %c0_i32_0 : i32, i32
  }
  func.func @transform_2(%arg0: i32) -> (i32, i32) {
    %c0_i32 = arith.constant 0 : i32
    %c0_i32_0 = arith.constant 0 : i32
    %c0_i32_1 = arith.constant 0 : i32
    return %c0_i32, %c0_i32_0 : i32, i32
  }
  func.func @transform_3(%arg0: i32) -> (i32, i32) {
    %c0_i32 = arith.constant 0 : i32
    %c0_i32_0 = arith.constant 0 : i32
    %c0_i32_1 = arith.constant 0 : i32
    return %c0_i32, %c0_i32_0 : i32, i32
  }
  func.func @transform_4(%arg0: i32) -> (i32, i32) {
    %c0_i32 = arith.constant 0 : i32
    %c0_i32_0 = arith.constant 0 : i32
    %c0_i32_1 = arith.constant 0 : i32
    return %c0_i32, %c0_i32_0 : i32, i32
  }
  func.func @transform_5(%arg0: i32) -> (i32, i32) {
    %c0_i32 = arith.constant 0 : i32
    %c0_i32_0 = arith.constant 0 : i32
    return %arg0, %c0_i32 : i32, i32
  }
}

</mosaic_0001>

<llo_original>
// kernel: tpu_custom_call.1
$region0: #{tpu_custom_call.1}
  #allocation0 [shape = 'u32[]', space=smem, size = 0x4, offset = 0x4, fixed_abs, tag = 'smem constant byte address 0x4 - core index']
  #allocation1 [shape = 'u32[72,128]{1,0:T(1,128)}', space=vmem, size = 0x9000, scoped, tag = 'internal scratch']
  %s0 = inlined_call_operand.hbm [shape: f32[2,3072], index: 0, kind: input, shape index: {}]
  %s1 = inlined_call_operand.hbm [shape: bf16[3072,256], index: 1, kind: input, shape index: {}]
  %s2 = inlined_call_operand.hbm [shape: f32[1,256], index: 2, kind: input, shape index: {}]
  %s3 = inlined_call_operand.hbm [shape: bf16[256,128], index: 3, kind: input, shape index: {}]
  %s4 = inlined_call_operand.hbm [shape: f32[1,128], index: 4, kind: input, shape index: {}]
  %s5 = inlined_call_operand.hbm [shape: f32[2,128], index: 5, kind: output, shape index: {}]
  %s6 = sld [smem:[#allocation0]]
  $region50: #{tpu_custom_call.1} parent=0
    _
  %s8 = ssub.s32 1, %s6
  %s9 = scalar_select 0, %s8, %s6
  $region1: #{tpu_custom_call.1} parent=0
    #allocation2 [shape = 'u8[98304]{0}', space=vmem, size = 0x18000, scoped, tag = 'input window, operand 0, single buffered']
    #allocation3 [shape = 's32[1]{0}', space=sflag, size = 0x4, scoped, tag = 'scoped memory for tpu_custom_call.1']
    #allocation4 [shape = 's32[1]{0}', space=sflag, size = 0x4, scoped, tag = 'scoped memory for tpu_custom_call.1']
    #allocation5 [shape = 'u8[1572864]{0}', space=vmem, size = 0x180000, scoped, tag = 'input window, operand 1, single buffered']
    #allocation6 [shape = 's32[1]{0}', space=sflag, size = 0x4, scoped, tag = 'scoped memory for tpu_custom_call.1']
    #allocation7 [shape = 'u8[1024]{0}', space=vmem, size = 0x400, scoped, tag = 'input window, operand 2, single buffered']
    #allocation8 [shape = 'u8[65536]{0}', space=vmem, size = 0x10000, scoped, tag = 'input window, operand 3, single buffered']
    #allocation9 [shape = 's32[1]{0}', space=sflag, size = 0x4, scoped, tag = 'scoped memory for tpu_custom_call.1']
    #allocation10 [shape = 'u8[512]{0}', space=vmem, size = 0x400, scoped, tag = 'input window, operand 4, single buffered']
    #allocation11 [shape = 'u8[4096]{0}', space=vmem, size = 0x1000, scoped, tag = 'output window, operand 0, single buffered']
    %10 = vsyncpa [#allocation3], 0
    %11 = vsyncpa [#allocation6], 0
    %12 = vsyncpa [#allocation9], 0
    %13 = vsyncpa [#allocation4], 0
    // Predicated region
    $region2: #{tpu_custom_call.1} parent=1 // pred_check
      _
    $region3: #{tpu_custom_call.1} parent=1 // pred_check_branch
      %15 = sbr.rel (0) target = $region5
    $region4: #{tpu_custom_call.1} parent=1 // pred_region
      %17 = vsyncadd [#allocation3], 2304
      %s18 = sshll.u32 %s0, 4
      %s19 = int_to_ptr.hbm [resolvable:$true] %s18
      %s20 = sshll.u32 [#allocation2], 4
      %s21 = int_to_ptr.vmem [resolvable:$true] %s20
      %26 = dma.hbm_to_vmem [thread:$0]  %s19, 768, %s21, [#allocation3], 768, 768, 48
    $region5: #{tpu_custom_call.1} parent=1 // pred_fallthru
      _
    // Predicated region
    $region6: #{tpu_custom_call.1} parent=1 // pred_check
      _
    $region7: #{tpu_custom_call.1} parent=1 // pred_check_branch
      %28 = sbr.rel (0) target = $region9
    $region8: #{tpu_custom_call.1} parent=1 // pred_region
      %30 = vsyncadd [#allocation6], 0
      %s31 = sshll.u32 %s1, 4
      %s32 = int_to_ptr.hbm [resolvable:$true] %s31
      %s33 = sshll.u32 [#allocation5], 4
      %s34 = int_to_ptr.vmem [resolvable:$true] %s33
      %39 = dma.hbm_to_vmem [thread:$0]  %s32, 49152, %s34, [#allocation6], 128, 128, 8
    $region9: #{tpu_custom_call.1} parent=1 // pred_fallthru
      _
    // Predicated region
    $region10: #{tpu_custom_call.1} parent=1 // pred_check
      _
    $region11: #{tpu_custom_call.1} parent=1 // pred_check_branch
      %41 = sbr.rel (0) target = $region13
    $region12: #{tpu_custom_call.1} parent=1 // pred_region
      %43 = vsyncadd [#allocation6], 0
      %s45 = sshll.u32 %s2, 4
      %s46 = int_to_ptr.hbm [resolvable:$true] %s45
      %s47 = sshll.u32 [#allocation7], 4
      %s48 = int_to_ptr.vmem [resolvable:$true] %s47
      %50 = dma.hbm_to_vmem [thread:$0]  %s46, 32, %s48, [#allocation6]
    $region13: #{tpu_custom_call.1} parent=1 // pred_fallthru
      _
    // Predicated region
    $region14: #{tpu_custom_call.1} parent=1 // pred_check
      _
    $region15: #{tpu_custom_call.1} parent=1 // pred_check_branch
      %52 = sbr.rel (0) target = $region17
    $region16: #{tpu_custom_call.1} parent=1 // pred_region
      %54 = vsyncadd [#allocation9], 0
      %s55 = sshll.u32 %s3, 4
      %s56 = int_to_ptr.hbm [resolvable:$true] %s55
      %s57 = sshll.u32 [#allocation8], 4
      %s58 = int_to_ptr.vmem [resolvable:$true] %s57
      %63 = dma.hbm_to_vmem [thread:$0]  %s56, 2048, %s58, [#allocation9], 64, 64, 4
    $region17: #{tpu_custom_call.1} parent=1 // pred_fallthru
      _
    // Predicated region
    $region18: #{tpu_custom_call.1} parent=1 // pred_check
      _
    $region19: #{tpu_custom_call.1} parent=1 // pred_check_branch
      %65 = sbr.rel (0) target = $region21
    $region20: #{tpu_custom_call.1} parent=1 // pred_region
      %67 = vsyncadd [#allocation9], 0
      %s69 = sshll.u32 %s4, 4
      %s70 = int_to_ptr.hbm [resolvable:$true] %s69
      %s71 = sshll.u32 [#allocation10], 4
      %s72 = int_to_ptr.vmem [resolvable:$true] %s71
      %74 = dma.hbm_to_vmem [thread:$0]  %s70, 16, %s72, [#allocation9]
    $region21: #{tpu_custom_call.1} parent=1 // pred_fallthru
      _
    // Predicated region
    $region22: #{tpu_custom_call.1} parent=1 // pred_check
      _
    $region23: #{tpu_custom_call.1} parent=1 // pred_check_branch
      %76 = sbr.rel (0) target = $region25
    $region24: #{tpu_custom_call.1} parent=1 // pred_region
      %78 = dma.done [#allocation3], 3072
    $region25: #{tpu_custom_call.1} parent=1 // pred_fallthru
      _
    // Predicated region
    $region26: #{tpu_custom_call.1} parent=1 // pred_check
      _
    $region27: #{tpu_custom_call.1} parent=1 // pred_check_branch
      %80 = sbr.rel (0) target = $region29
    $region28: #{tpu_custom_call.1} parent=1 // pred_region
      %82 = dma.done [#allocation6], 49152
    $region29: #{tpu_custom_call.1} parent=1 // pred_fallthru
      _
    // Predicated region
    $region30: #{tpu_custom_call.1} parent=1 // pred_check
      _
    $region31: #{tpu_custom_call.1} parent=1 // pred_check_branch
      %84 = sbr.rel (0) target = $region33
    $region32: #{tpu_custom_call.1} parent=1 // pred_region
      %86 = dma.done [#allocation6], 32
    $region33: #{tpu_custom_call.1} parent=1 // pred_fallthru
      _
    // Predicated region
    $region34: #{tpu_custom_call.1} parent=1 // pred_check
      _
    $region35: #{tpu_custom_call.1} parent=1 // pred_check_branch
      %88 = sbr.rel (0) target = $region37
    $region36: #{tpu_custom_call.1} parent=1 // pred_region
      %90 = dma.done [#allocation9], 2048
    $region37: #{tpu_custom_call.1} parent=1 // pred_fallthru
      _
    // Predicated region
    $region38: #{tpu_custom_call.1} parent=1 // pred_check
      _
    $region39: #{tpu_custom_call.1} parent=1 // pred_check_branch
      %92 = sbr.rel (0) target = $region41
    $region40: #{tpu_custom_call.1} parent=1 // pred_region
      %94 = dma.done [#allocation9], 16
    $region41: #{tpu_custom_call.1} parent=1 // pred_fallthru
      _
    %v95 = vld [vmem:[#allocation2] sm:$0xff]
    %v96 = vld [vmem:[#allocation2 + $0x8] sm:$0xff]
    %v97 = vld [vmem:[#allocation2 + $0x10] sm:$0xff]
    %v98 = vld [vmem:[#allocation2 + $0x18] sm:$0xff]
    %v99 = vld [vmem:[#allocation2 + $0x20] sm:$0xff]
    %v100 = vld [vmem:[#allocation2 + $0x28] sm:$0xff]
    %v101 = vld [vmem:[#allocation2 + $0x30] sm:$0xff]
    %v102 = vld [vmem:[#allocation2 + $0x38] sm:$0xff]
    %v103 = vld [vmem:[#allocation2 + $0x40] sm:$0xff]
    %v104 = vld [vmem:[#allocation2 + $0x48] sm:$0xff]
    %v105 = vld [vmem:[#allocation2 + $0x50] sm:$0xff]
    %v106 = vld [vmem:[#allocation2 + $0x58] sm:$0xff]
    %v107 = vld [vmem:[#allocation2 + $0x60] sm:$0xff]
    %v108 = vld [vmem:[#allocation2 + $0x68] sm:$0xff]
    %v109 = vld [vmem:[#allocation2 + $0x70] sm:$0xff]
    %v110 = vld [vmem:[#allocation2 + $0x78] sm:$0xff]
    %v111 = vld [vmem:[#allocation2 + $0x80] sm:$0xff]
    %v112 = vld [vmem:[#allocation2 + $0x88] sm:$0xff]
    %v113 = vld [vmem:[#allocation2 + $0x90] sm:$0xff]
    %v114 = vld [vmem:[#allocation2 + $0x98] sm:$0xff]
    %v115 = vld [vmem:[#allocation2 + $0xa0] sm:$0xff]
    %v116 = vld [vmem:[#allocation2 + $0xa8] sm:$0xff]
    %v117 = vld [vmem:[#allocation2 + $0xb0] sm:$0xff]
    %v118 = vld [vmem:[#allocation2 + $0xb8] sm:$0xff]
    %143 = vst [vmem:[#allocation1] ss:$4 sm:$0xff] %v95
    %s144 = scalar_lea.vmem [#allocation1], 1
    %145 = vst [vmem:[%s144] ss:$4 sm:$0xff] %v101
    %s146 = scalar_lea.vmem [#allocation1], 2
    %147 = vst [vmem:[%s146] ss:$4 sm:$0xff] %v107
    %s148 = scalar_lea.vmem [#allocation1], 3
    %149 = vst [vmem:[%s148] ss:$4 sm:$0xff] %v113
    %s150 = scalar_lea.vmem [#allocation1], 32
    %151 = vst [vmem:[%s150] ss:$4 sm:$0xff] %v96
    %s152 = scalar_lea.vmem [#allocation1], 33
    %153 = vst [vmem:[%s152] ss:$4 sm:$0xff] %v102
    %s154 = scalar_lea.vmem [#allocation1], 34
    %155 = vst [vmem:[%s154] ss:$4 sm:$0xff] %v108
    %s156 = scalar_lea.vmem [#allocation1], 35
    %157 = vst [vmem:[%s156] ss:$4 sm:$0xff] %v114
    %v158 = vld.sshfl [vmem:[#allocation1] sm:$0xff pattern:$0x73625140]
    %v159 = vld.sshfl [vmem:[#allocation1 + $0x8] sm:$0xff pattern:$0x73625140]
    %v160 = vld.sshfl [vmem:[#allocation1 + $0x10] sm:$0xff pattern:$0x73625140]
    %v161 = vld.sshfl [vmem:[#allocation1 + $0x18] sm:$0xff pattern:$0x73625140]
    %v162 = vld.sshfl [vmem:[#allocation1 + $0x20] sm:$0xff pattern:$0x73625140]
    %v163 = vld.sshfl [vmem:[#allocation1 + $0x28] sm:$0xff pattern:$0x73625140]
    %v164 = vld.sshfl [vmem:[#allocation1 + $0x30] sm:$0xff pattern:$0x73625140]
    %v165 = vld.sshfl [vmem:[#allocation1 + $0x38] sm:$0xff pattern:$0x73625140]
    %166 = vst [vmem:[#allocation1] ss:$4 sm:$0xff] %v97
    %167 = vst [vmem:[%s144] ss:$4 sm:$0xff] %v103
    %168 = vst [vmem:[%s146] ss:$4 sm:$0xff] %v109
    %169 = vst [vmem:[%s148] ss:$4 sm:$0xff] %v115
    %170 = vst [vmem:[%s150] ss:$4 sm:$0xff] %v98
    %171 = vst [vmem:[%s152] ss:$4 sm:$0xff] %v104
    %172 = vst [vmem:[%s154] ss:$4 sm:$0xff] %v110
    %173 = vst [vmem:[%s156] ss:$4 sm:$0xff] %v116
    %v174 = vld.sshfl [vmem:[#allocation1] sm:$0xff pattern:$0x73625140]
    %v175 = vld.sshfl [vmem:[#allocation1 + $0x8] sm:$0xff pattern:$0x73625140]
    %v176 = vld.sshfl [vmem:[#allocation1 + $0x10] sm:$0xff pattern:$0x73625140]
    %v177 = vld.sshfl [vmem:[#allocation1 + $0x18] sm:$0xff pattern:$0x73625140]
    %v178 = vld.sshfl [vmem:[#allocation1 + $0x20] sm:$0xff pattern:$0x73625140]
    %v179 = vld.sshfl [vmem:[#allocation1 + $0x28] sm:$0xff pattern:$0x73625140]
    %v180 = vld.sshfl [vmem:[#allocation1 + $0x30] sm:$0xff pattern:$0x73625140]
    %v181 = vld.sshfl [vmem:[#allocation1 + $0x38] sm:$0xff pattern:$0x73625140]
    %182 = vst [vmem:[#allocation1] ss:$4 sm:$0xff] %v99
    %183 = vst [vmem:[%s144] ss:$4 sm:$0xff] %v105
    %184 = vst [vmem:[%s146] ss:$4 sm:$0xff] %v111
    %185 = vst [vmem:[%s148] ss:$4 sm:$0xff] %v117
    %186 = vst [vmem:[%s150] ss:$4 sm:$0xff] %v100
    %187 = vst [vmem:[%s152] ss:$4 sm:$0xff] %v106
    %188 = vst [vmem:[%s154] ss:$4 sm:$0xff] %v112
    %189 = vst [vmem:[%s156] ss:$4 sm:$0xff] %v118
    %v190 = vld.sshfl [vmem:[#allocation1] sm:$0xff pattern:$0x73625140]
    %v191 = vld.sshfl [vmem:[#allocation1 + $0x8] sm:$0xff pattern:$0x73625140]
    %v192 = vld.sshfl [vmem:[#allocation1 + $0x10] sm:$0xff pattern:$0x73625140]
    %v193 = vld.sshfl [vmem:[#allocation1 + $0x18] sm:$0xff pattern:$0x73625140]
    %v194 = vld.sshfl [vmem:[#allocation1 + $0x20] sm:$0xff pattern:$0x73625140]
    %v195 = vld.sshfl [vmem:[#allocation1 + $0x28] sm:$0xff pattern:$0x73625140]
    %v196 = vld.sshfl [vmem:[#allocation1 + $0x30] sm:$0xff pattern:$0x73625140]
    %v197 = vld.sshfl [vmem:[#allocation1 + $0x38] sm:$0xff pattern:$0x73625140]
    %v222 = vpack.c.bf16 %v158, %v158
    %v223 = vpack.c.bf16 %v159, %v159
    %v224 = vpack.c.bf16 %v160, %v160
    %v225 = vpack.c.bf16 %v161, %v161
    %v226 = vpack.c.bf16 %v162, %v162
    %v227 = vpack.c.bf16 %v163, %v163
    %v228 = vpack.c.bf16 %v164, %v164
    %v229 = vpack.c.bf16 %v165, %v165
    %v230 = vpack.c.bf16 %v174, %v174
    %v231 = vpack.c.bf16 %v175, %v175
    %v232 = vpack.c.bf16 %v176, %v176
    %v233 = vpack.c.bf16 %v177, %v177
    %v234 = vpack.c.bf16 %v178, %v178
    %v235 = vpack.c.bf16 %v179, %v179
    %v236 = vpack.c.bf16 %v180, %v180
    %v237 = vpack.c.bf16 %v181, %v181
    %v238 = vpack.c.bf16 %v190, %v190
    %v239 = vpack.c.bf16 %v191, %v191
    %v240 = vpack.c.bf16 %v192, %v192
    %v241 = vpack.c.bf16 %v193, %v193
    %v242 = vpack.c.bf16 %v194, %v194
    %v243 = vpack.c.bf16 %v195, %v195
    %v244 = vpack.c.bf16 %v196, %v196
    %v245 = vpack.c.bf16 %v197, %v197
    %v246 = vld [vmem:[#allocation5] sm:$0xff]
    %v247 = vld [vmem:[#allocation5 + $0x8] sm:$0xff]
    %v248 = vld [vmem:[#allocation5 + $0x10] sm:$0xff]
    %v249 = vld [vmem:[#allocation5 + $0x18] sm:$0xff]
    %v250 = vld [vmem:[#allocation5 + $0x20] sm:$0xff]
    %v251 = vld [vmem:[#allocation5 + $0x28] sm:$0xff]
    %v252 = vld [vmem:[#allocation5 + $0x30] sm:$0xff]
    %v253 = vld [vmem:[#allocation5 + $0x38] sm:$0xff]
    %v254 = vld [vmem:[#allocation5 + $0x40] sm:$0xff]
    %v255 = vld [vmem:[#allocation5 + $0x48] sm:$0xff]
    %v256 = vld [vmem:[#allocation5 + $0x50] sm:$0xff]
    %v257 = vld [vmem:[#allocation5 + $0x58] sm:$0xff]
    %v258 = vld [vmem:[#allocation5 + $0x60] sm:$0xff]
    %v259 = vld [vmem:[#allocation5 + $0x68] sm:$0xff]
    %v260 = vld [vmem:[#allocation5 + $0x70] sm:$0xff]
    %v261 = vld [vmem:[#allocation5 + $0x78] sm:$0xff]
    %v262 = vld [vmem:[#allocation5 + $0x80] sm:$0xff]
    %v263 = vld [vmem:[#allocation5 + $0x88] sm:$0xff]
    %v264 = vld [vmem:[#allocation5 + $0x90] sm:$0xff]
    %v265 = vld [vmem:[#allocation5 + $0x98] sm:$0xff]
    %v266 = vld [vmem:[#allocation5 + $0xa0] sm:$0xff]
    %v267 = vld [vmem:[#allocation5 + $0xa8] sm:$0xff]
    %v268 = vld [vmem:[#allocation5 + $0xb0] sm:$0xff]
    %v269 = vld [vmem:[#allocation5 + $0xb8] sm:$0xff]
    %v270 = vld [vmem:[#allocation5 + $0xc0] sm:$0xff]
    %v271 = vld [vmem:[#allocation5 + $0xc8] sm:$0xff]
    %v272 = vld [vmem:[#allocation5 + $0xd0] sm:$0xff]
    %v273 = vld [vmem:[#allocation5 + $0xd8] sm:$0xff]
    %v274 = vld [vmem:[#allocation5 + $0xe0] sm:$0xff]
    %v275 = vld [vmem:[#allocation5 + $0xe8] sm:$0xff]
    %v276 = vld [vmem:[#allocation5 + $0xf0] sm:$0xff]
    %v277 = vld [vmem:[#allocation5 + $0xf8] sm:$0xff]
    %v278 = vld [vmem:[#allocation5 + $0x100] sm:$0xff]
    %v279 = vld [vmem:[#allocation5 + $0x108] sm:$0xff]
    %v280 = vld [vmem:[#allocation5 + $0x110] sm:$0xff]
    %v281 = vld [vmem:[#allocation5 + $0x118] sm:$0xff]
    %v282 = vld [vmem:[#allocation5 + $0x120] sm:$0xff]
    %v283 = vld [vmem:[#allocation5 + $0x128] sm:$0xff]
    %v284 = vld [vmem:[#allocation5 + $0x130] sm:$0xff]
    %v285 = vld [vmem:[#allocation5 + $0x138] sm:$0xff]
    %v286 = vld [vmem:[#allocation5 + $0x140] sm:$0xff]
    %v287 = vld [vmem:[#allocation5 + $0x148] sm:$0xff]
    %v288 = vld [vmem:[#allocation5 + $0x150] sm:$0xff]
    %v289 = vld [vmem:[#allocation5 + $0x158] sm:$0xff]
    %v290 = vld [vmem:[#allocation5 + $0x160] sm:$0xff]
    %v291 = vld [vmem:[#allocation5 + $0x168] sm:$0xff]
    %v292 = vld [vmem:[#allocation5 + $0x170] sm:$0xff]
    %v293 = vld [vmem:[#allocation5 + $0x178] sm:$0xff]
    %v294 = vld [vmem:[#allocation5 + $0x180] sm:$0xff]
    %v295 = vld [vmem:[#allocation5 + $0x188] sm:$0xff]
    %v296 = vld [vmem:[#allocation5 + $0x190] sm:$0xff]
    %v297 = vld [vmem:[#allocation5 + $0x198] sm:$0xff]
    %v298 = vld [vmem:[#allocation5 + $0x1a0] sm:$0xff]
    %v299 = vld [vmem:[#allocation5 + $0x1a8] sm:$0xff]
    %v300 = vld [vmem:[#allocation5 + $0x1b0] sm:$0xff]
    %v301 = vld [vmem:[#allocation5 + $0x1b8] sm:$0xff]
    %v302 = vld [vmem:[#allocation5 + $0x1c0] sm:$0xff]
    %v303 = vld [vmem:[#allocation5 + $0x1c8] sm:$0xff]
    %v304 = vld [vmem:[#allocation5 + $0x1d0] sm:$0xff]
    %v305 = vld [vmem:[#allocation5 + $0x1d8] sm:$0xff]
    %v306 = vld [vmem:[#allocation5 + $0x1e0] sm:$0xff]
    %v307 = vld [vmem:[#allocation5 + $0x1e8] sm:$0xff]
    %v308 = vld [vmem:[#allocation5 + $0x1f0] sm:$0xff]
    %v309 = vld [vmem:[#allocation5 + $0x1f8] sm:$0xff]
    %v310 = vld [vmem:[#allocation5 + $0x200] sm:$0xff]
    %v311 = vld [vmem:[#allocation5 + $0x208] sm:$0xff]
    %v312 = vld [vmem:[#allocation5 + $0x210] sm:$0xff]
    %v313 = vld [vmem:[#allocation5 + $0x218] sm:$0xff]
    %v314 = vld [vmem:[#allocation5 + $0x220] sm:$0xff]
    %v315 = vld [vmem:[#allocation5 + $0x228] sm:$0xff]
    %v316 = vld [vmem:[#allocation5 + $0x230] sm:$0xff]
    %v317 = vld [vmem:[#allocation5 + $0x238] sm:$0xff]
    %v318 = vld [vmem:[#allocation5 + $0x240] sm:$0xff]
    %v319 = vld [vmem:[#allocation5 + $0x248] sm:$0xff]
    %v320 = vld [vmem:[#allocation5 + $0x250] sm:$0xff]
    %v321 = vld [vmem:[#allocation5 + $0x258] sm:$0xff]
    %v322 = vld [vmem:[#allocation5 + $0x260] sm:$0xff]
    %v323 = vld [vmem:[#allocation5 + $0x268] sm:$0xff]
    %v324 = vld [vmem:[#allocation5 + $0x270] sm:$0xff]
    %v325 = vld [vmem:[#allocation5 + $0x278] sm:$0xff]
    %v326 = vld [vmem:[#allocation5 + $0x280] sm:$0xff]
    %v327 = vld [vmem:[#allocation5 + $0x288] sm:$0xff]
    %v328 = vld [vmem:[#allocation5 + $0x290] sm:$0xff]
    %v329 = vld [vmem:[#allocation5 + $0x298] sm:$0xff]
    %v330 = vld [vmem:[#allocation5 + $0x2a0] sm:$0xff]
    %v331 = vld [vmem:[#allocation5 + $0x2a8] sm:$0xff]
    %v332 = vld [vmem:[#allocation5 + $0x2b0] sm:$0xff]
    %v333 = vld [vmem:[#allocation5 + $0x2b8] sm:$0xff]
    %v334 = vld [vmem:[#allocation5 + $0x2c0] sm:$0xff]
    %v335 = vld [vmem:[#allocation5 + $0x2c8] sm:$0xff]
    %v336 = vld [vmem:[#allocation5 + $0x2d0] sm:$0xff]
    %v337 = vld [vmem:[#allocation5 + $0x2d8] sm:$0xff]
    %v338 = vld [vmem:[#allocation5 + $0x2e0] sm:$0xff]
    %v339 = vld [vmem:[#allocation5 + $0x2e8] sm:$0xff]
    %v340 = vld [vmem:[#allocation5 + $0x2f0] sm:$0xff]
    %v341 = vld [vmem:[#allocation5 + $0x2f8] sm:$0xff]
    %v342 = vld [vmem:[#allocation5 + $0x300] sm:$0xff]
    %v343 = vld [vmem:[#allocation5 + $0x308] sm:$0xff]
    %v344 = vld [vmem:[#allocation5 + $0x310] sm:$0xff]
    %v345 = vld [vmem:[#allocation5 + $0x318] sm:$0xff]
    %v346 = vld [vmem:[#allocation5 + $0x320] sm:$0xff]
    %v347 = vld [vmem:[#allocation5 + $0x328] sm:$0xff]
    %v348 = vld [vmem:[#allocation5 + $0x330] sm:$0xff]
    %v349 = vld [vmem:[#allocation5 + $0x338] sm:$0xff]
    %v350 = vld [vmem:[#allocation5 + $0x340] sm:$0xff]
    %v351 = vld [vmem:[#allocation5 + $0x348] sm:$0xff]
    %v352 = vld [vmem:[#allocation5 + $0x350] sm:$0xff]
    %v353 = vld [vmem:[#allocation5 + $0x358] sm:$0xff]
    %v354 = vld [vmem:[#allocation5 + $0x360] sm:$0xff]
    %v355 = vld [vmem:[#allocation5 + $0x368] sm:$0xff]
    %v356 = vld [vmem:[#allocation5 + $0x370] sm:$0xff]
    %v357 = vld [vmem:[#allocation5 + $0x378] sm:$0xff]
    %v358 = vld [vmem:[#allocation5 + $0x380] sm:$0xff]
    %v359 = vld [vmem:[#allocation5 + $0x388] sm:$0xff]
    %v360 = vld [vmem:[#allocation5 + $0x390] sm:$0xff]
    %v361 = vld [vmem:[#allocation5 + $0x398] sm:$0xff]
    %v362 = vld [vmem:[#allocation5 + $0x3a0] sm:$0xff]
    %v363 = vld [vmem:[#allocation5 + $0x3a8] sm:$0xff]
    %v364 = vld [vmem:[#allocation5 + $0x3b0] sm:$0xff]
    %v365 = vld [vmem:[#allocation5 + $0x3b8] sm:$0xff]
    %v366 = vld [vmem:[#allocation5 + $0x3c0] sm:$0xff]
    %v367 = vld [vmem:[#allocation5 + $0x3c8] sm:$0xff]
    %v368 = vld [vmem:[#allocation5 + $0x3d0] sm:$0xff]
    %v369 = vld [vmem:[#allocation5 + $0x3d8] sm:$0xff]
    %v370 = vld [vmem:[#allocation5 + $0x3e0] sm:$0xff]
    %v371 = vld [vmem:[#allocation5 + $0x3e8] sm:$0xff]
    %v372 = vld [vmem:[#allocation5 + $0x3f0] sm:$0xff]
    %v373 = vld [vmem:[#allocation5 + $0x3f8] sm:$0xff]
    %v374 = vld [vmem:[#allocation5 + $0x400] sm:$0xff]
    %v375 = vld [vmem:[#allocation5 + $0x408] sm:$0xff]
    %v376 = vld [vmem:[#allocation5 + $0x410] sm:$0xff]
    %v377 = vld [vmem:[#allocation5 + $0x418] sm:$0xff]
    %v378 = vld [vmem:[#allocation5 + $0x420] sm:$0xff]
    %v379 = vld [vmem:[#allocation5 + $0x428] sm:$0xff]
    %v380 = vld [vmem:[#allocation5 + $0x430] sm:$0xff]
    %v381 = vld [vmem:[#allocation5 + $0x438] sm:$0xff]
    %v382 = vld [vmem:[#allocation5 + $0x440] sm:$0xff]
    %v383 = vld [vmem:[#allocation5 + $0x448] sm:$0xff]
    %v384 = vld [vmem:[#allocation5 + $0x450] sm:$0xff]
    %v385 = vld [vmem:[#allocation5 + $0x458] sm:$0xff]
    %v386 = vld [vmem:[#allocation5 + $0x460] sm:$0xff]
    %v387 = vld [vmem:[#allocation5 + $0x468] sm:$0xff]
    %v388 = vld [vmem:[#allocation5 + $0x470] sm:$0xff]
    %v389 = vld [vmem:[#allocation5 + $0x478] sm:$0xff]
    %v390 = vld [vmem:[#allocation5 + $0x480] sm:$0xff]
    %v391 = vld [vmem:[#allocation5 + $0x488] sm:$0xff]
    %v392 = vld [vmem:[#allocation5 + $0x490] sm:$0xff]
    %v393 = vld [vmem:[#allocation5 + $0x498] sm:$0xff]
    %v394 = vld [vmem:[#allocation5 + $0x4a0] sm:$0xff]
    %v395 = vld [vmem:[#allocation5 + $0x4a8] sm:$0xff]
    %v396 = vld [vmem:[#allocation5 + $0x4b0] sm:$0xff]
    %v397 = vld [vmem:[#allocation5 + $0x4b8] sm:$0xff]
    %v398 = vld [vmem:[#allocation5 + $0x4c0] sm:$0xff]
    %v399 = vld [vmem:[#allocation5 + $0x4c8] sm:$0xff]
    %v400 = vld [vmem:[#allocation5 + $0x4d0] sm:$0xff]
    %v401 = vld [vmem:[#allocation5 + $0x4d8] sm:$0xff]
    %v402 = vld [vmem:[#allocation5 + $0x4e0] sm:$0xff]
    %v403 = vld [vmem:[#allocation5 + $0x4e8] sm:$0xff]
    %v404 = vld [vmem:[#allocation5 + $0x4f0] sm:$0xff]
    %v405 = vld [vmem:[#allocation5 + $0x4f8] sm:$0xff]
    %v406 = vld [vmem:[#allocation5 + $0x500] sm:$0xff]
    %v407 = vld [vmem:[#allocation5 + $0x508] sm:$0xff]
    %v408 = vld [vmem:[#allocation5 + $0x510] sm:$0xff]
    %v409 = vld [vmem:[#allocation5 + $0x518] sm:$0xff]
    %v410 = vld [vmem:[#allocation5 + $0x520] sm:$0xff]
    %v411 = vld [vmem:[#allocation5 + $0x528] sm:$0xff]
    %v412 = vld [vmem:[#allocation5 + $0x530] sm:$0xff]
    %v413 = vld [vmem:[#allocation5 + $0x538] sm:$0xff]
    %v414 = vld [vmem:[#allocation5 + $0x540] sm:$0xff]
    %v415 = vld [vmem:[#allocation5 + $0x548] sm:$0xff]
    %v416 = vld [vmem:[#allocation5 + $0x550] sm:$0xff]
    %v417 = vld [vmem:[#allocation5 + $0x558] sm:$0xff]
    %v418 = vld [vmem:[#allocation5 + $0x560] sm:$0xff]
    %v419 = vld [vmem:[#allocation5 + $0x568] sm:$0xff]
    %v420 = vld [vmem:[#allocation5 + $0x570] sm:$0xff]
    %v421 = vld [vmem:[#allocation5 + $0x578] sm:$0xff]
    %v422 = vld [vmem:[#allocation5 + $0x580] sm:$0xff]
    %v423 = vld [vmem:[#allocation5 + $0x588] sm:$0xff]
    %v424 = vld [vmem:[#allocation5 + $0x590] sm:$0xff]
    %v425 = vld [vmem:[#allocation5 + $0x598] sm:$0xff]
    %v426 = vld [vmem:[#allocation5 + $0x5a0] sm:$0xff]
    %v427 = vld [vmem:[#allocation5 + $0x5a8] sm:$0xff]
    %v428 = vld [vmem:[#allocation5 + $0x5b0] sm:$0xff]
    %v429 = vld [vmem:[#allocation5 + $0x5b8] sm:$0xff]
    %v430 = vld [vmem:[#allocation5 + $0x5c0] sm:$0xff]
    %v431 = vld [vmem:[#allocation5 + $0x5c8] sm:$0xff]
    %v432 = vld [vmem:[#allocation5 + $0x5d0] sm:$0xff]
    %v433 = vld [vmem:[#allocation5 + $0x5d8] sm:$0xff]
    %v434 = vld [vmem:[#allocation5 + $0x5e0] sm:$0xff]
    %v435 = vld [vmem:[#allocation5 + $0x5e8] sm:$0xff]
    %v436 = vld [vmem:[#allocation5 + $0x5f0] sm:$0xff]
    %v437 = vld [vmem:[#allocation5 + $0x5f8] sm:$0xff]
    %v438 = vld [vmem:[#allocation5 + $0x600] sm:$0xff]
    %v439 = vld [vmem:[#allocation5 + $0x608] sm:$0xff]
    %v440 = vld [vmem:[#allocation5 + $0x610] sm:$0xff]
    %v441 = vld [vmem:[#allocation5 + $0x618] sm:$0xff]
    %v442 = vld [vmem:[#allocation5 + $0x620] sm:$0xff]
    %v443 = vld [vmem:[#allocation5 + $0x628] sm:$0xff]
    %v444 = vld [vmem:[#allocation5 + $0x630] sm:$0xff]
    %v445 = vld [vmem:[#allocation5 + $0x638] sm:$0xff]
    %v446 = vld [vmem:[#allocation5 + $0x640] sm:$0xff]
    %v447 = vld [vmem:[#allocation5 + $0x648] sm:$0xff]
    %v448 = vld [vmem:[#allocation5 + $0x650] sm:$0xff]
    %v449 = vld [vmem:[#allocation5 + $0x658] sm:$0xff]
    %v450 = vld [vmem:[#allocation5 + $0x660] sm:$0xff]
    %v451 = vld [vmem:[#allocation5 + $0x668] sm:$0xff]
    %v452 = vld [vmem:[#allocation5 + $0x670] sm:$0xff]
    %v453 = vld [vmem:[#allocation5 + $0x678] sm:$0xff]
    %v454 = vld [vmem:[#allocation5 + $0x680] sm:$0xff]
    %v455 = vld [vmem:[#allocation5 + $0x688] sm:$0xff]
    %v456 = vld [vmem:[#allocation5 + $0x690] sm:$0xff]
    %v457 = vld [vmem:[#allocation5 + $0x698] sm:$0xff]
    %v458 = vld [vmem:[#allocation5 + $0x6a0] sm:$0xff]
    %v459 = vld [vmem:[#allocation5 + $0x6a8] sm:$0xff]
    %v460 = vld [vmem:[#allocation5 + $0x6b0] sm:$0xff]
    %v461 = vld [vmem:[#allocation5 + $0x6b8] sm:$0xff]
    %v462 = vld [vmem:[#allocation5 + $0x6c0] sm:$0xff]
    %v463 = vld [vmem:[#allocation5 + $0x6c8] sm:$0xff]
    %v464 = vld [vmem:[#allocation5 + $0x6d0] sm:$0xff]
    %v465 = vld [vmem:[#allocation5 + $0x6d8] sm:$0xff]
    %v466 = vld [vmem:[#allocation5 + $0x6e0] sm:$0xff]
    %v467 = vld [vmem:[#allocation5 + $0x6e8] sm:$0xff]
    %v468 = vld [vmem:[#allocation5 + $0x6f0] sm:$0xff]
    %v469 = vld [vmem:[#allocation5 + $0x6f8] sm:$0xff]
    %v470 = vld [vmem:[#allocation5 + $0x700] sm:$0xff]
    %v471 = vld [vmem:[#allocation5 + $0x708] sm:$0xff]
    %v472 = vld [vmem:[#allocation5 + $0x710] sm:$0xff]
    %v473 = vld [vmem:[#allocation5 + $0x718] sm:$0xff]
    %v474 = vld [vmem:[#allocation5 + $0x720] sm:$0xff]
    %v475 = vld [vmem:[#allocation5 + $0x728] sm:$0xff]
    %v476 = vld [vmem:[#allocation5 + $0x730] sm:$0xff]
    %v477 = vld [vmem:[#allocation5 + $0x738] sm:$0xff]
    %v478 = vld [vmem:[#allocation5 + $0x740] sm:$0xff]
    %v479 = vld [vmem:[#allocation5 + $0x748] sm:$0xff]
    %v480 = vld [vmem:[#allocation5 + $0x750] sm:$0xff]
    %v481 = vld [vmem:[#allocation5 + $0x758] sm:$0xff]
    %v482 = vld [vmem:[#allocation5 + $0x760] sm:$0xff]
    %v483 = vld [vmem:[#allocation5 + $0x768] sm:$0xff]
    %v484 = vld [vmem:[#allocation5 + $0x770] sm:$0xff]
    %v485 = vld [vmem:[#allocation5 + $0x778] sm:$0xff]
    %v486 = vld [vmem:[#allocation5 + $0x780] sm:$0xff]
    %v487 = vld [vmem:[#allocation5 + $0x788] sm:$0xff]
    %v488 = vld [vmem:[#allocation5 + $0x790] sm:$0xff]
    %v489 = vld [vmem:[#allocation5 + $0x798] sm:$0xff]
    %v490 = vld [vmem:[#allocation5 + $0x7a0] sm:$0xff]
    %v491 = vld [vmem:[#allocation5 + $0x7a8] sm:$0xff]
    %v492 = vld [vmem:[#allocation5 + $0x7b0] sm:$0xff]
    %v493 = vld [vmem:[#allocation5 + $0x7b8] sm:$0xff]
    %v494 = vld [vmem:[#allocation5 + $0x7c0] sm:$0xff]
    %v495 = vld [vmem:[#allocation5 + $0x7c8] sm:$0xff]
    %v496 = vld [vmem:[#allocation5 + $0x7d0] sm:$0xff]
    %v497 = vld [vmem:[#allocation5 + $0x7d8] sm:$0xff]
    %v498 = vld [vmem:[#allocation5 + $0x7e0] sm:$0xff]
    %v499 = vld [vmem:[#allocation5 + $0x7e8] sm:$0xff]
    %v500 = vld [vmem:[#allocation5 + $0x7f0] sm:$0xff]
    %v501 = vld [vmem:[#allocation5 + $0x7f8] sm:$0xff]
    %v502 = vld [vmem:[#allocation5 + $0x800] sm:$0xff]
    %v503 = vld [vmem:[#allocation5 + $0x808] sm:$0xff]
    %v504 = vld [vmem:[#allocation5 + $0x810] sm:$0xff]
    %v505 = vld [vmem:[#allocation5 + $0x818] sm:$0xff]
    %v506 = vld [vmem:[#allocation5 + $0x820] sm:$0xff]
    %v507 = vld [vmem:[#allocation5 + $0x828] sm:$0xff]
    %v508 = vld [vmem:[#allocation5 + $0x830] sm:$0xff]
    %v509 = vld [vmem:[#allocation5 + $0x838] sm:$0xff]
    %v510 = vld [vmem:[#allocation5 + $0x840] sm:$0xff]
    %v511 = vld [vmem:[#allocation5 + $0x848] sm:$0xff]
    %v512 = vld [vmem:[#allocation5 + $0x850] sm:$0xff]
    %v513 = vld [vmem:[#allocation5 + $0x858] sm:$0xff]
    %v514 = vld [vmem:[#allocation5 + $0x860] sm:$0xff]
    %v515 = vld [vmem:[#allocation5 + $0x868] sm:$0xff]
    %v516 = vld [vmem:[#allocation5 + $0x870] sm:$0xff]
    %v517 = vld [vmem:[#allocation5 + $0x878] sm:$0xff]
    %v518 = vld [vmem:[#allocation5 + $0x880] sm:$0xff]
    %v519 = vld [vmem:[#allocation5 + $0x888] sm:$0xff]
    %v520 = vld [vmem:[#allocation5 + $0x890] sm:$0xff]
    %v521 = vld [vmem:[#allocation5 + $0x898] sm:$0xff]
    %v522 = vld [vmem:[#allocation5 + $0x8a0] sm:$0xff]
    %v523 = vld [vmem:[#allocation5 + $0x8a8] sm:$0xff]
    %v524 = vld [vmem:[#allocation5 + $0x8b0] sm:$0xff]
    %v525 = vld [vmem:[#allocation5 + $0x8b8] sm:$0xff]
    %v526 = vld [vmem:[#allocation5 + $0x8c0] sm:$0xff]
    %v527 = vld [vmem:[#allocation5 + $0x8c8] sm:$0xff]
    %v528 = vld [vmem:[#allocation5 + $0x8d0] sm:$0xff]
    %v529 = vld [vmem:[#allocation5 + $0x8d8] sm:$0xff]
    %v530 = vld [vmem:[#allocation5 + $0x8e0] sm:$0xff]
    %v531 = vld [vmem:[#allocation5 + $0x8e8] sm:$0xff]
    %v532 = vld [vmem:[#allocation5 + $0x8f0] sm:$0xff]
    %v533 = vld [vmem:[#allocation5 + $0x8f8] sm:$0xff]
    %v534 = vld [vmem:[#allocation5 + $0x900] sm:$0xff]
    %v535 = vld [vmem:[#allocation5 + $0x908] sm:$0xff]
    %v536 = vld [vmem:[#allocation5 + $0x910] sm:$0xff]
    %v537 = vld [vmem:[#allocation5 + $0x918] sm:$0xff]
    %v538 = vld [vmem:[#allocation5 + $0x920] sm:$0xff]
    %v539 = vld [vmem:[#allocation5 + $0x928] sm:$0xff]
    %v540 = vld [vmem:[#allocation5 + $0x930] sm:$0xff]
    %v541 = vld [vmem:[#allocation5 + $0x938] sm:$0xff]
    %v542 = vld [vmem:[#allocation5 + $0x940] sm:$0xff]
    %v543 = vld [vmem:[#allocation5 + $0x948] sm:$0xff]
    %v544 = vld [vmem:[#allocation5 + $0x950] sm:$0xff]
    %v545 = vld [vmem:[#allocation5 + $0x958] sm:$0xff]
    %v546 = vld [vmem:[#allocation5 + $0x960] sm:$0xff]
    %v547 = vld [vmem:[#allocation5 + $0x968] sm:$0xff]
    %v548 = vld [vmem:[#allocation5 + $0x970] sm:$0xff]
    %v549 = vld [vmem:[#allocation5 + $0x978] sm:$0xff]
    %v550 = vld [vmem:[#allocation5 + $0x980] sm:$0xff]
    %v551 = vld [vmem:[#allocation5 + $0x988] sm:$0xff]
    %v552 = vld [vmem:[#allocation5 + $0x990] sm:$0xff]
    %v553 = vld [vmem:[#allocation5 + $0x998] sm:$0xff]
    %v554 = vld [vmem:[#allocation5 + $0x9a0] sm:$0xff]
    %v555 = vld [vmem:[#allocation5 + $0x9a8] sm:$0xff]
    %v556 = vld [vmem:[#allocation5 + $0x9b0] sm:$0xff]
    %v557 = vld [vmem:[#allocation5 + $0x9b8] sm:$0xff]
    %v558 = vld [vmem:[#allocation5 + $0x9c0] sm:$0xff]
    %v559 = vld [vmem:[#allocation5 + $0x9c8] sm:$0xff]
    %v560 = vld [vmem:[#allocation5 + $0x9d0] sm:$0xff]
    %v561 = vld [vmem:[#allocation5 + $0x9d8] sm:$0xff]
    %v562 = vld [vmem:[#allocation5 + $0x9e0] sm:$0xff]
    %v563 = vld [vmem:[#allocation5 + $0x9e8] sm:$0xff]
    %v564 = vld [vmem:[#allocation5 + $0x9f0] sm:$0xff]
    %v565 = vld [vmem:[#allocation5 + $0x9f8] sm:$0xff]
    %v566 = vld [vmem:[#allocation5 + $0xa00] sm:$0xff]
    %v567 = vld [vmem:[#allocation5 + $0xa08] sm:$0xff]
    %v568 = vld [vmem:[#allocation5 + $0xa10] sm:$0xff]
    %v569 = vld [vmem:[#allocation5 + $0xa18] sm:$0xff]
    %v570 = vld [vmem:[#allocation5 + $0xa20] sm:$0xff]
    %v571 = vld [vmem:[#allocation5 + $0xa28] sm:$0xff]
    %v572 = vld [vmem:[#allocation5 + $0xa30] sm:$0xff]
    %v573 = vld [vmem:[#allocation5 + $0xa38] sm:$0xff]
    %v574 = vld [vmem:[#allocation5 + $0xa40] sm:$0xff]
    %v575 = vld [vmem:[#allocation5 + $0xa48] sm:$0xff]
    %v576 = vld [vmem:[#allocation5 + $0xa50] sm:$0xff]
    %v577 = vld [vmem:[#allocation5 + $0xa58] sm:$0xff]
    %v578 = vld [vmem:[#allocation5 + $0xa60] sm:$0xff]
    %v579 = vld [vmem:[#allocation5 + $0xa68] sm:$0xff]
    %v580 = vld [vmem:[#allocation5 + $0xa70] sm:$0xff]
    %v581 = vld [vmem:[#allocation5 + $0xa78] sm:$0xff]
    %v582 = vld [vmem:[#allocation5 + $0xa80] sm:$0xff]
    %v583 = vld [vmem:[#allocation5 + $0xa88] sm:$0xff]
    %v584 = vld [vmem:[#allocation5 + $0xa90] sm:$0xff]
    %v585 = vld [vmem:[#allocation5 + $0xa98] sm:$0xff]
    %v586 = vld [vmem:[#allocation5 + $0xaa0] sm:$0xff]
    %v587 = vld [vmem:[#allocation5 + $0xaa8] sm:$0xff]
    %v588 = vld [vmem:[#allocation5 + $0xab0] sm:$0xff]
    %v589 = vld [vmem:[#allocation5 + $0xab8] sm:$0xff]
    %v590 = vld [vmem:[#allocation5 + $0xac0] sm:$0xff]
    %v591 = vld [vmem:[#allocation5 + $0xac8] sm:$0xff]
    %v592 = vld [vmem:[#allocation5 + $0xad0] sm:$0xff]
    %v593 = vld [vmem:[#allocation5 + $0xad8] sm:$0xff]
    %v594 = vld [vmem:[#allocation5 + $0xae0] sm:$0xff]
    %v595 = vld [vmem:[#allocation5 + $0xae8] sm:$0xff]
    %v596 = vld [vmem:[#allocation5 + $0xaf0] sm:$0xff]
    %v597 = vld [vmem:[#allocation5 + $0xaf8] sm:$0xff]
    %v598 = vld [vmem:[#allocation5 + $0xb00] sm:$0xff]
    %v599 = vld [vmem:[#allocation5 + $0xb08] sm:$0xff]
    %v600 = vld [vmem:[#allocation5 + $0xb10] sm:$0xff]
    %v601 = vld [vmem:[#allocation5 + $0xb18] sm:$0xff]
    %v602 = vld [vmem:[#allocation5 + $0xb20] sm:$0xff]
    %v603 = vld [vmem:[#allocation5 + $0xb28] sm:$0xff]
    %v604 = vld [vmem:[#allocation5 + $0xb30] sm:$0xff]
    %v605 = vld [vmem:[#allocation5 + $0xb38] sm:$0xff]
    %v606 = vld [vmem:[#allocation5 + $0xb40] sm:$0xff]
    %v607 = vld [vmem:[#allocation5 + $0xb48] sm:$0xff]
    %v608 = vld [vmem:[#allocation5 + $0xb50] sm:$0xff]
    %v609 = vld [vmem:[#allocation5 + $0xb58] sm:$0xff]
    %v610 = vld [vmem:[#allocation5 + $0xb60] sm:$0xff]
    %v611 = vld [vmem:[#allocation5 + $0xb68] sm:$0xff]
    %v612 = vld [vmem:[#allocation5 + $0xb70] sm:$0xff]
    %v613 = vld [vmem:[#allocation5 + $0xb78] sm:$0xff]
    %v614 = vld [vmem:[#allocation5 + $0xb80] sm:$0xff]
    %v615 = vld [vmem:[#allocation5 + $0xb88] sm:$0xff]
    %v616 = vld [vmem:[#allocation5 + $0xb90] sm:$0xff]
    %v617 = vld [vmem:[#allocation5 + $0xb98] sm:$0xff]
    %v618 = vld [vmem:[#allocation5 + $0xba0] sm:$0xff]
    %v619 = vld [vmem:[#allocation5 + $0xba8] sm:$0xff]
    %v620 = vld [vmem:[#allocation5 + $0xbb0] sm:$0xff]
    %v621 = vld [vmem:[#allocation5 + $0xbb8] sm:$0xff]
    %v622 = vld [vmem:[#allocation5 + $0xbc0] sm:$0xff]
    %v623 = vld [vmem:[#allocation5 + $0xbc8] sm:$0xff]
    %v624 = vld [vmem:[#allocation5 + $0xbd0] sm:$0xff]
    %v625 = vld [vmem:[#allocation5 + $0xbd8] sm:$0xff]
    %v626 = vld [vmem:[#allocation5 + $0xbe0] sm:$0xff]
    %v627 = vld [vmem:[#allocation5 + $0xbe8] sm:$0xff]
    %v628 = vld [vmem:[#allocation5 + $0xbf0] sm:$0xff]
    %v629 = vld [vmem:[#allocation5 + $0xbf8] sm:$0xff]
    %v630 = vld [vmem:[#allocation7] sm:$0x3]
    %v632 = vperm.slane %v630, 0
    %v633 = vperm.slane %v630, 1
    %v1020 = vunpack.c.l.b16 %v246
    %v1021 = vunpack.c.h.b16 %v246
    %v1022 = vunpack.c.l.b16 %v247
    %v1023 = vunpack.c.h.b16 %v247
    %v1024 = vunpack.c.l.b16 %v248
    %v1025 = vunpack.c.h.b16 %v248
    %v1026 = vunpack.c.l.b16 %v249
    %v1027 = vunpack.c.h.b16 %v249
    %v1028 = vunpack.c.l.b16 %v250
    %v1029 = vunpack.c.h.b16 %v250
    %v1030 = vunpack.c.l.b16 %v251
    %v1031 = vunpack.c.h.b16 %v251
    %v1032 = vunpack.c.l.b16 %v252
    %v1033 = vunpack.c.h.b16 %v252
    %v1034 = vunpack.c.l.b16 %v253
    %v1035 = vunpack.c.h.b16 %v253
    %v1036 = vunpack.c.l.b16 %v254
    %v1037 = vunpack.c.h.b16 %v254
    %v1038 = vunpack.c.l.b16 %v255
    %v1039 = vunpack.c.h.b16 %v255
    %v1040 = vunpack.c.l.b16 %v256
    %v1041 = vunpack.c.h.b16 %v256
    %v1042 = vunpack.c.l.b16 %v257
    %v1043 = vunpack.c.h.b16 %v257
    %v1044 = vunpack.c.l.b16 %v258
    %v1045 = vunpack.c.h.b16 %v258
    %v1046 = vunpack.c.l.b16 %v259
    %v1047 = vunpack.c.h.b16 %v259
    %v1048 = vunpack.c.l.b16 %v260
    %v1049 = vunpack.c.h.b16 %v260
    %v1050 = vunpack.c.l.b16 %v261
    %v1051 = vunpack.c.h.b16 %v261
    %v1052 = vunpack.c.l.b16 %v262
    %v1053 = vunpack.c.h.b16 %v262
    %v1054 = vunpack.c.l.b16 %v263
    %v1055 = vunpack.c.h.b16 %v263
    %v1056 = vunpack.c.l.b16 %v264
    %v1057 = vunpack.c.h.b16 %v264
    %v1058 = vunpack.c.l.b16 %v265
    %v1059 = vunpack.c.h.b16 %v265
    %v1060 = vunpack.c.l.b16 %v266
    %v1061 = vunpack.c.h.b16 %v266
    %v1062 = vunpack.c.l.b16 %v267
    %v1063 = vunpack.c.h.b16 %v267
    %v1064 = vunpack.c.l.b16 %v268
    %v1065 = vunpack.c.h.b16 %v268
    %v1066 = vunpack.c.l.b16 %v269
    %v1067 = vunpack.c.h.b16 %v269
    %v1068 = vunpack.c.l.b16 %v270
    %v1069 = vunpack.c.h.b16 %v270
    %v1070 = vunpack.c.l.b16 %v271
    %v1071 = vunpack.c.h.b16 %v271
    %v1072 = vunpack.c.l.b16 %v272
    %v1073 = vunpack.c.h.b16 %v272
    %v1074 = vunpack.c.l.b16 %v273
    %v1075 = vunpack.c.h.b16 %v273
    %v1076 = vunpack.c.l.b16 %v274
    %v1077 = vunpack.c.h.b16 %v274
    %v1078 = vunpack.c.l.b16 %v275
    %v1079 = vunpack.c.h.b16 %v275
    %v1080 = vunpack.c.l.b16 %v276
    %v1081 = vunpack.c.h.b16 %v276
    %v1082 = vunpack.c.l.b16 %v277
    %v1083 = vunpack.c.h.b16 %v277
    %v1084 = vunpack.c.l.b16 %v278
    %v1085 = vunpack.c.h.b16 %v278
    %v1086 = vunpack.c.l.b16 %v279
    %v1087 = vunpack.c.h.b16 %v279
    %v1088 = vunpack.c.l.b16 %v280
    %v1089 = vunpack.c.h.b16 %v280
    %v1090 = vunpack.c.l.b16 %v281
    %v1091 = vunpack.c.h.b16 %v281
    %v1092 = vunpack.c.l.b16 %v282
    %v1093 = vunpack.c.h.b16 %v282
    %v1094 = vunpack.c.l.b16 %v283
    %v1095 = vunpack.c.h.b16 %v283
    %v1096 = vunpack.c.l.b16 %v284
    %v1097 = vunpack.c.h.b16 %v284
    %v1098 = vunpack.c.l.b16 %v285
    %v1099 = vunpack.c.h.b16 %v285
    %v1100 = vunpack.c.l.b16 %v286
    %v1101 = vunpack.c.h.b16 %v286
    %v1102 = vunpack.c.l.b16 %v287
    %v1103 = vunpack.c.h.b16 %v287
    %v1104 = vunpack.c.l.b16 %v288
    %v1105 = vunpack.c.h.b16 %v288
    %v1106 = vunpack.c.l.b16 %v289
    %v1107 = vunpack.c.h.b16 %v289
    %v1108 = vunpack.c.l.b16 %v290
    %v1109 = vunpack.c.h.b16 %v290
    %v1110 = vunpack.c.l.b16 %v291
    %v1111 = vunpack.c.h.b16 %v291
    %v1112 = vunpack.c.l.b16 %v292
    %v1113 = vunpack.c.h.b16 %v292
    %v1114 = vunpack.c.l.b16 %v293
    %v1115 = vunpack.c.h.b16 %v293
    %v1116 = vunpack.c.l.b16 %v294
    %v1117 = vunpack.c.h.b16 %v294
    %v1118 = vunpack.c.l.b16 %v295
    %v1119 = vunpack.c.h.b16 %v295
    %v1120 = vunpack.c.l.b16 %v296
    %v1121 = vunpack.c.h.b16 %v296
    %v1122 = vunpack.c.l.b16 %v297
    %v1123 = vunpack.c.h.b16 %v297
    %v1124 = vunpack.c.l.b16 %v298
    %v1125 = vunpack.c.h.b16 %v298
    %v1126 = vunpack.c.l.b16 %v299
    %v1127 = vunpack.c.h.b16 %v299
    %v1128 = vunpack.c.l.b16 %v300
    %v1129 = vunpack.c.h.b16 %v300
    %v1130 = vunpack.c.l.b16 %v301
    %v1131 = vunpack.c.h.b16 %v301
    %v1132 = vunpack.c.l.b16 %v302
    %v1133 = vunpack.c.h.b16 %v302
    %v1134 = vunpack.c.l.b16 %v303
    %v1135 = vunpack.c.h.b16 %v303
    %v1136 = vunpack.c.l.b16 %v304
    %v1137 = vunpack.c.h.b16 %v304
    %v1138 = vunpack.c.l.b16 %v305
    %v1139 = vunpack.c.h.b16 %v305
    %v1140 = vunpack.c.l.b16 %v306
    %v1141 = vunpack.c.h.b16 %v306
    %v1142 = vunpack.c.l.b16 %v307
    %v1143 = vunpack.c.h.b16 %v307
    %v1144 = vunpack.c.l.b16 %v308
    %v1145 = vunpack.c.h.b16 %v308
    %v1146 = vunpack.c.l.b16 %v309
    %v1147 = vunpack.c.h.b16 %v309
    %v1148 = vunpack.c.l.b16 %v310
    %v1149 = vunpack.c.h.b16 %v310
    %v1150 = vunpack.c.l.b16 %v311
    %v1151 = vunpack.c.h.b16 %v311
    %v1152 = vunpack.c.l.b16 %v312
    %v1153 = vunpack.c.h.b16 %v312
    %v1154 = vunpack.c.l.b16 %v313
    %v1155 = vunpack.c.h.b16 %v313
    %v1156 = vunpack.c.l.b16 %v314
    %v1157 = vunpack.c.h.b16 %v314
    %v1158 = vunpack.c.l.b16 %v315
    %v1159 = vunpack.c.h.b16 %v315
    %v1160 = vunpack.c.l.b16 %v316
    %v1161 = vunpack.c.h.b16 %v316
    %v1162 = vunpack.c.l.b16 %v317
    %v1163 = vunpack.c.h.b16 %v317
    %v1164 = vunpack.c.l.b16 %v318
    %v1165 = vunpack.c.h.b16 %v318
    %v1166 = vunpack.c.l.b16 %v319
    %v1167 = vunpack.c.h.b16 %v319
    %v1168 = vunpack.c.l.b16 %v320
    %v1169 = vunpack.c.h.b16 %v320
    %v1170 = vunpack.c.l.b16 %v321
    %v1171 = vunpack.c.h.b16 %v321
    %v1172 = vunpack.c.l.b16 %v322
    %v1173 = vunpack.c.h.b16 %v322
    %v1174 = vunpack.c.l.b16 %v323
    %v1175 = vunpack.c.h.b16 %v323
    %v1176 = vunpack.c.l.b16 %v324
    %v1177 = vunpack.c.h.b16 %v324
    %v1178 = vunpack.c.l.b16 %v325
    %v1179 = vunpack.c.h.b16 %v325
    %v1180 = vunpack.c.l.b16 %v326
    %v1181 = vunpack.c.h.b16 %v326
    %v1182 = vunpack.c.l.b16 %v327
    %v1183 = vunpack.c.h.b16 %v327
    %v1184 = vunpack.c.l.b16 %v328
    %v1185 = vunpack.c.h.b16 %v328
    %v1186 = vunpack.c.l.b16 %v329
    %v1187 = vunpack.c.h.b16 %v329
    %v1188 = vunpack.c.l.b16 %v330
    %v1189 = vunpack.c.h.b16 %v330
    %v1190 = vunpack.c.l.b16 %v331
    %v1191 = vunpack.c.h.b16 %v331
    %v1192 = vunpack.c.l.b16 %v332
    %v1193 = vunpack.c.h.b16 %v332
    %v1194 = vunpack.c.l.b16 %v333
    %v1195 = vunpack.c.h.b16 %v333
    %v1196 = vunpack.c.l.b16 %v334
    %v1197 = vunpack.c.h.b16 %v334
    %v1198 = vunpack.c.l.b16 %v335
    %v1199 = vunpack.c.h.b16 %v335
    %v1200 = vunpack.c.l.b16 %v336
    %v1201 = vunpack.c.h.b16 %v336
    %v1202 = vunpack.c.l.b16 %v337
    %v1203 = vunpack.c.h.b16 %v337
    %v1204 = vunpack.c.l.b16 %v338
    %v1205 = vunpack.c.h.b16 %v338
    %v1206 = vunpack.c.l.b16 %v339
    %v1207 = vunpack.c.h.b16 %v339
    %v1208 = vunpack.c.l.b16 %v340
    %v1209 = vunpack.c.h.b16 %v340
    %v1210 = vunpack.c.l.b16 %v341
    %v1211 = vunpack.c.h.b16 %v341
    %v1212 = vunpack.c.l.b16 %v342
    %v1213 = vunpack.c.h.b16 %v342
    %v1214 = vunpack.c.l.b16 %v343
    %v1215 = vunpack.c.h.b16 %v343
    %v1216 = vunpack.c.l.b16 %v344
    %v1217 = vunpack.c.h.b16 %v344
    %v1218 = vunpack.c.l.b16 %v345
    %v1219 = vunpack.c.h.b16 %v345
    %v1220 = vunpack.c.l.b16 %v346
    %v1221 = vunpack.c.h.b16 %v346
    %v1222 = vunpack.c.l.b16 %v347
    %v1223 = vunpack.c.h.b16 %v347
    %v1224 = vunpack.c.l.b16 %v348
    %v1225 = vunpack.c.h.b16 %v348
    %v1226 = vunpack.c.l.b16 %v349
    %v1227 = vunpack.c.h.b16 %v349
    %v1228 = vunpack.c.l.b16 %v350
    %v1229 = vunpack.c.h.b16 %v350
    %v1230 = vunpack.c.l.b16 %v351
    %v1231 = vunpack.c.h.b16 %v351
    %v1232 = vunpack.c.l.b16 %v352
    %v1233 = vunpack.c.h.b16 %v352
    %v1234 = vunpack.c.l.b16 %v353
    %v1235 = vunpack.c.h.b16 %v353
    %v1236 = vunpack.c.l.b16 %v354
    %v1237 = vunpack.c.h.b16 %v354
    %v1238 = vunpack.c.l.b16 %v355
    %v1239 = vunpack.c.h.b16 %v355
    %v1240 = vunpack.c.l.b16 %v356
    %v1241 = vunpack.c.h.b16 %v356
    %v1242 = vunpack.c.l.b16 %v357
    %v1243 = vunpack.c.h.b16 %v357
    %v1244 = vunpack.c.l.b16 %v358
    %v1245 = vunpack.c.h.b16 %v358
    %v1246 = vunpack.c.l.b16 %v359
    %v1247 = vunpack.c.h.b16 %v359
    %v1248 = vunpack.c.l.b16 %v360
    %v1249 = vunpack.c.h.b16 %v360
    %v1250 = vunpack.c.l.b16 %v361
    %v1251 = vunpack.c.h.b16 %v361
    %v1252 = vunpack.c.l.b16 %v362
    %v1253 = vunpack.c.h.b16 %v362
    %v1254 = vunpack.c.l.b16 %v363
    %v1255 = vunpack.c.h.b16 %v363
    %v1256 = vunpack.c.l.b16 %v364
    %v1257 = vunpack.c.h.b16 %v364
    %v1258 = vunpack.c.l.b16 %v365
    %v1259 = vunpack.c.h.b16 %v365
    %v1260 = vunpack.c.l.b16 %v366
    %v1261 = vunpack.c.h.b16 %v366
    %v1262 = vunpack.c.l.b16 %v367
    %v1263 = vunpack.c.h.b16 %v367
    %v1264 = vunpack.c.l.b16 %v368
    %v1265 = vunpack.c.h.b16 %v368
    %v1266 = vunpack.c.l.b16 %v369
    %v1267 = vunpack.c.h.b16 %v369
    %v1268 = vunpack.c.l.b16 %v370
    %v1269 = vunpack.c.h.b16 %v370
    %v1270 = vunpack.c.l.b16 %v371
    %v1271 = vunpack.c.h.b16 %v371
    %v1272 = vunpack.c.l.b16 %v372
    %v1273 = vunpack.c.h.b16 %v372
    %v1274 = vunpack.c.l.b16 %v373
    %v1275 = vunpack.c.h.b16 %v373
    %v1276 = vunpack.c.l.b16 %v374
    %v1277 = vunpack.c.h.b16 %v374
    %v1278 = vunpack.c.l.b16 %v375
    %v1279 = vunpack.c.h.b16 %v375
    %v1280 = vunpack.c.l.b16 %v376
    %v1281 = vunpack.c.h.b16 %v376
    %v1282 = vunpack.c.l.b16 %v377
    %v1283 = vunpack.c.h.b16 %v377
    %v1284 = vunpack.c.l.b16 %v378
    %v1285 = vunpack.c.h.b16 %v378
    %v1286 = vunpack.c.l.b16 %v379
    %v1287 = vunpack.c.h.b16 %v379
    %v1288 = vunpack.c.l.b16 %v380
    %v1289 = vunpack.c.h.b16 %v380
    %v1290 = vunpack.c.l.b16 %v381
    %v1291 = vunpack.c.h.b16 %v381
    %v1292 = vunpack.c.l.b16 %v382
    %v1293 = vunpack.c.h.b16 %v382
    %v1294 = vunpack.c.l.b16 %v383
    %v1295 = vunpack.c.h.b16 %v383
    %v1296 = vunpack.c.l.b16 %v384
    %v1297 = vunpack.c.h.b16 %v384
    %v1298 = vunpack.c.l.b16 %v385
    %v1299 = vunpack.c.h.b16 %v385
    %v1300 = vunpack.c.l.b16 %v386
    %v1301 = vunpack.c.h.b16 %v386
    %v1302 = vunpack.c.l.b16 %v387
    %v1303 = vunpack.c.h.b16 %v387
    %v1304 = vunpack.c.l.b16 %v388
    %v1305 = vunpack.c.h.b16 %v388
    %v1306 = vunpack.c.l.b16 %v389
    %v1307 = vunpack.c.h.b16 %v389
    %v1308 = vunpack.c.l.b16 %v390
    %v1309 = vunpack.c.h.b16 %v390
    %v1310 = vunpack.c.l.b16 %v391
    %v1311 = vunpack.c.h.b16 %v391
    %v1312 = vunpack.c.l.b16 %v392
    %v1313 = vunpack.c.h.b16 %v392
    %v1314 = vunpack.c.l.b16 %v393
    %v1315 = vunpack.c.h.b16 %v393
    %v1316 = vunpack.c.l.b16 %v394
    %v1317 = vunpack.c.h.b16 %v394
    %v1318 = vunpack.c.l.b16 %v395
    %v1319 = vunpack.c.h.b16 %v395
    %v1320 = vunpack.c.l.b16 %v396
    %v1321 = vunpack.c.h.b16 %v396
    %v1322 = vunpack.c.l.b16 %v397
    %v1323 = vunpack.c.h.b16 %v397
    %v1324 = vunpack.c.l.b16 %v398
    %v1325 = vunpack.c.h.b16 %v398
    %v1326 = vunpack.c.l.b16 %v399
    %v1327 = vunpack.c.h.b16 %v399
    %v1328 = vunpack.c.l.b16 %v400
    %v1329 = vunpack.c.h.b16 %v400
    %v1330 = vunpack.c.l.b16 %v401
    %v1331 = vunpack.c.h.b16 %v401
    %v1332 = vunpack.c.l.b16 %v402
    %v1333 = vunpack.c.h.b16 %v402
    %v1334 = vunpack.c.l.b16 %v403
    %v1335 = vunpack.c.h.b16 %v403
    %v1336 = vunpack.c.l.b16 %v404
    %v1337 = vunpack.c.h.b16 %v404
    %v1338 = vunpack.c.l.b16 %v405
    %v1339 = vunpack.c.h.b16 %v405
    %v1340 = vunpack.c.l.b16 %v406
    %v1341 = vunpack.c.h.b16 %v406
    %v1342 = vunpack.c.l.b16 %v407
    %v1343 = vunpack.c.h.b16 %v407
    %v1344 = vunpack.c.l.b16 %v408
    %v1345 = vunpack.c.h.b16 %v408
    %v1346 = vunpack.c.l.b16 %v409
    %v1347 = vunpack.c.h.b16 %v409
    %v1348 = vunpack.c.l.b16 %v410
    %v1349 = vunpack.c.h.b16 %v410
    %v1350 = vunpack.c.l.b16 %v411
    %v1351 = vunpack.c.h.b16 %v411
    %v1352 = vunpack.c.l.b16 %v412
    %v1353 = vunpack.c.h.b16 %v412
    %v1354 = vunpack.c.l.b16 %v413
    %v1355 = vunpack.c.h.b16 %v413
    %v1356 = vunpack.c.l.b16 %v414
    %v1357 = vunpack.c.h.b16 %v414
    %v1358 = vunpack.c.l.b16 %v415
    %v1359 = vunpack.c.h.b16 %v415
    %v1360 = vunpack.c.l.b16 %v416
    %v1361 = vunpack.c.h.b16 %v416
    %v1362 = vunpack.c.l.b16 %v417
    %v1363 = vunpack.c.h.b16 %v417
    %v1364 = vunpack.c.l.b16 %v418
    %v1365 = vunpack.c.h.b16 %v418
    %v1366 = vunpack.c.l.b16 %v419
    %v1367 = vunpack.c.h.b16 %v419
    %v1368 = vunpack.c.l.b16 %v420
    %v1369 = vunpack.c.h.b16 %v420
    %v1370 = vunpack.c.l.b16 %v421
    %v1371 = vunpack.c.h.b16 %v421
    %v1372 = vunpack.c.l.b16 %v422
    %v1373 = vunpack.c.h.b16 %v422
    %v1374 = vunpack.c.l.b16 %v423
    %v1375 = vunpack.c.h.b16 %v423
    %v1376 = vunpack.c.l.b16 %v424
    %v1377 = vunpack.c.h.b16 %v424
    %v1378 = vunpack.c.l.b16 %v425
    %v1379 = vunpack.c.h.b16 %v425
    %v1380 = vunpack.c.l.b16 %v426
    %v1381 = vunpack.c.h.b16 %v426
    %v1382 = vunpack.c.l.b16 %v427
    %v1383 = vunpack.c.h.b16 %v427
    %v1384 = vunpack.c.l.b16 %v428
    %v1385 = vunpack.c.h.b16 %v428
    %v1386 = vunpack.c.l.b16 %v429
    %v1387 = vunpack.c.h.b16 %v429
    %v1388 = vunpack.c.l.b16 %v430
    %v1389 = vunpack.c.h.b16 %v430
    %v1390 = vunpack.c.l.b16 %v431
    %v1391 = vunpack.c.h.b16 %v431
    %v1392 = vunpack.c.l.b16 %v432
    %v1393 = vunpack.c.h.b16 %v432
    %v1394 = vunpack.c.l.b16 %v433
    %v1395 = vunpack.c.h.b16 %v433
    %v1396 = vunpack.c.l.b16 %v434
    %v1397 = vunpack.c.h.b16 %v434
    %v1398 = vunpack.c.l.b16 %v435
    %v1399 = vunpack.c.h.b16 %v435
    %v1400 = vunpack.c.l.b16 %v436
    %v1401 = vunpack.c.h.b16 %v436
    %v1402 = vunpack.c.l.b16 %v437
    %v1403 = vunpack.c.h.b16 %v437
    %v1404 = vunpack.c.l.b16 %v438
    %v1405 = vunpack.c.h.b16 %v438
    %v1406 = vunpack.c.l.b16 %v439
    %v1407 = vunpack.c.h.b16 %v439
    %v1408 = vunpack.c.l.b16 %v440
    %v1409 = vunpack.c.h.b16 %v440
    %v1410 = vunpack.c.l.b16 %v441
    %v1411 = vunpack.c.h.b16 %v441
    %v1412 = vunpack.c.l.b16 %v442
    %v1413 = vunpack.c.h.b16 %v442
    %v1414 = vunpack.c.l.b16 %v443
    %v1415 = vunpack.c.h.b16 %v443
    %v1416 = vunpack.c.l.b16 %v444
    %v1417 = vunpack.c.h.b16 %v444
    %v1418 = vunpack.c.l.b16 %v445
    %v1419 = vunpack.c.h.b16 %v445
    %v1420 = vunpack.c.l.b16 %v446
    %v1421 = vunpack.c.h.b16 %v446
    %v1422 = vunpack.c.l.b16 %v447
    %v1423 = vunpack.c.h.b16 %v447
    %v1424 = vunpack.c.l.b16 %v448
    %v1425 = vunpack.c.h.b16 %v448
    %v1426 = vunpack.c.l.b16 %v449
    %v1427 = vunpack.c.h.b16 %v449
    %v1428 = vunpack.c.l.b16 %v450
    %v1429 = vunpack.c.h.b16 %v450
    %v1430 = vunpack.c.l.b16 %v451
    %v1431 = vunpack.c.h.b16 %v451
    %v1432 = vunpack.c.l.b16 %v452
    %v1433 = vunpack.c.h.b16 %v452
    %v1434 = vunpack.c.l.b16 %v453
    %v1435 = vunpack.c.h.b16 %v453
    %v1436 = vunpack.c.l.b16 %v454
    %v1437 = vunpack.c.h.b16 %v454
    %v1438 = vunpack.c.l.b16 %v455
    %v1439 = vunpack.c.h.b16 %v455
    %v1440 = vunpack.c.l.b16 %v456
    %v1441 = vunpack.c.h.b16 %v456
    %v1442 = vunpack.c.l.b16 %v457
    %v1443 = vunpack.c.h.b16 %v457
    %v1444 = vunpack.c.l.b16 %v458
    %v1445 = vunpack.c.h.b16 %v458
    %v1446 = vunpack.c.l.b16 %v459
    %v1447 = vunpack.c.h.b16 %v459
    %v1448 = vunpack.c.l.b16 %v460
    %v1449 = vunpack.c.h.b16 %v460
    %v1450 = vunpack.c.l.b16 %v461
    %v1451 = vunpack.c.h.b16 %v461
    %v1452 = vunpack.c.l.b16 %v462
    %v1453 = vunpack.c.h.b16 %v462
    %v1454 = vunpack.c.l.b16 %v463
    %v1455 = vunpack.c.h.b16 %v463
    %v1456 = vunpack.c.l.b16 %v464
    %v1457 = vunpack.c.h.b16 %v464
    %v1458 = vunpack.c.l.b16 %v465
    %v1459 = vunpack.c.h.b16 %v465
    %v1460 = vunpack.c.l.b16 %v466
    %v1461 = vunpack.c.h.b16 %v466
    %v1462 = vunpack.c.l.b16 %v467
    %v1463 = vunpack.c.h.b16 %v467
    %v1464 = vunpack.c.l.b16 %v468
    %v1465 = vunpack.c.h.b16 %v468
    %v1466 = vunpack.c.l.b16 %v469
    %v1467 = vunpack.c.h.b16 %v469
    %v1468 = vunpack.c.l.b16 %v470
    %v1469 = vunpack.c.h.b16 %v470
    %v1470 = vunpack.c.l.b16 %v471
    %v1471 = vunpack.c.h.b16 %v471
    %v1472 = vunpack.c.l.b16 %v472
    %v1473 = vunpack.c.h.b16 %v472
    %v1474 = vunpack.c.l.b16 %v473
    %v1475 = vunpack.c.h.b16 %v473
    %v1476 = vunpack.c.l.b16 %v474
    %v1477 = vunpack.c.h.b16 %v474
    %v1478 = vunpack.c.l.b16 %v475
    %v1479 = vunpack.c.h.b16 %v475
    %v1480 = vunpack.c.l.b16 %v476
    %v1481 = vunpack.c.h.b16 %v476
    %v1482 = vunpack.c.l.b16 %v477
    %v1483 = vunpack.c.h.b16 %v477
    %v1484 = vunpack.c.l.b16 %v478
    %v1485 = vunpack.c.h.b16 %v478
    %v1486 = vunpack.c.l.b16 %v479
    %v1487 = vunpack.c.h.b16 %v479
    %v1488 = vunpack.c.l.b16 %v480
    %v1489 = vunpack.c.h.b16 %v480
    %v1490 = vunpack.c.l.b16 %v481
    %v1491 = vunpack.c.h.b16 %v481
    %v1492 = vunpack.c.l.b16 %v482
    %v1493 = vunpack.c.h.b16 %v482
    %v1494 = vunpack.c.l.b16 %v483
    %v1495 = vunpack.c.h.b16 %v483
    %v1496 = vunpack.c.l.b16 %v484
    %v1497 = vunpack.c.h.b16 %v484
    %v1498 = vunpack.c.l.b16 %v485
    %v1499 = vunpack.c.h.b16 %v485
    %v1500 = vunpack.c.l.b16 %v486
    %v1501 = vunpack.c.h.b16 %v486
    %v1502 = vunpack.c.l.b16 %v487
    %v1503 = vunpack.c.h.b16 %v487
    %v1504 = vunpack.c.l.b16 %v488
    %v1505 = vunpack.c.h.b16 %v488
    %v1506 = vunpack.c.l.b16 %v489
    %v1507 = vunpack.c.h.b16 %v489
    %v1508 = vunpack.c.l.b16 %v490
    %v1509 = vunpack.c.h.b16 %v490
    %v1510 = vunpack.c.l.b16 %v491
    %v1511 = vunpack.c.h.b16 %v491
    %v1512 = vunpack.c.l.b16 %v492
    %v1513 = vunpack.c.h.b16 %v492
    %v1514 = vunpack.c.l.b16 %v493
    %v1515 = vunpack.c.h.b16 %v493
    %v1516 = vunpack.c.l.b16 %v494
    %v1517 = vunpack.c.h.b16 %v494
    %v1518 = vunpack.c.l.b16 %v495
    %v1519 = vunpack.c.h.b16 %v495
    %v1520 = vunpack.c.l.b16 %v496
    %v1521 = vunpack.c.h.b16 %v496
    %v1522 = vunpack.c.l.b16 %v497
    %v1523 = vunpack.c.h.b16 %v497
    %v1524 = vunpack.c.l.b16 %v498
    %v1525 = vunpack.c.h.b16 %v498
    %v1526 = vunpack.c.l.b16 %v499
    %v1527 = vunpack.c.h.b16 %v499
    %v1528 = vunpack.c.l.b16 %v500
    %v1529 = vunpack.c.h.b16 %v500
    %v1530 = vunpack.c.l.b16 %v501
    %v1531 = vunpack.c.h.b16 %v501
    %v1532 = vunpack.c.l.b16 %v502
    %v1533 = vunpack.c.h.b16 %v502
    %v1534 = vunpack.c.l.b16 %v503
    %v1535 = vunpack.c.h.b16 %v503
    %v1536 = vunpack.c.l.b16 %v504
    %v1537 = vunpack.c.h.b16 %v504
    %v1538 = vunpack.c.l.b16 %v505
    %v1539 = vunpack.c.h.b16 %v505
    %v1540 = vunpack.c.l.b16 %v506
    %v1541 = vunpack.c.h.b16 %v506
    %v1542 = vunpack.c.l.b16 %v507
    %v1543 = vunpack.c.h.b16 %v507
    %v1544 = vunpack.c.l.b16 %v508
    %v1545 = vunpack.c.h.b16 %v508
    %v1546 = vunpack.c.l.b16 %v509
    %v1547 = vunpack.c.h.b16 %v509
    %v1548 = vunpack.c.l.b16 %v510
    %v1549 = vunpack.c.h.b16 %v510
    %v1550 = vunpack.c.l.b16 %v511
    %v1551 = vunpack.c.h.b16 %v511
    %v1552 = vunpack.c.l.b16 %v512
    %v1553 = vunpack.c.h.b16 %v512
    %v1554 = vunpack.c.l.b16 %v513
    %v1555 = vunpack.c.h.b16 %v513
    %v1556 = vunpack.c.l.b16 %v514
    %v1557 = vunpack.c.h.b16 %v514
    %v1558 = vunpack.c.l.b16 %v515
    %v1559 = vunpack.c.h.b16 %v515
    %v1560 = vunpack.c.l.b16 %v516
    %v1561 = vunpack.c.h.b16 %v516
    %v1562 = vunpack.c.l.b16 %v517
    %v1563 = vunpack.c.h.b16 %v517
    %v1564 = vunpack.c.l.b16 %v518
    %v1565 = vunpack.c.h.b16 %v518
    %v1566 = vunpack.c.l.b16 %v519
    %v1567 = vunpack.c.h.b16 %v519
    %v1568 = vunpack.c.l.b16 %v520
    %v1569 = vunpack.c.h.b16 %v520
    %v1570 = vunpack.c.l.b16 %v521
    %v1571 = vunpack.c.h.b16 %v521
    %v1572 = vunpack.c.l.b16 %v522
    %v1573 = vunpack.c.h.b16 %v522
    %v1574 = vunpack.c.l.b16 %v523
    %v1575 = vunpack.c.h.b16 %v523
    %v1576 = vunpack.c.l.b16 %v524
    %v1577 = vunpack.c.h.b16 %v524
    %v1578 = vunpack.c.l.b16 %v525
    %v1579 = vunpack.c.h.b16 %v525
    %v1580 = vunpack.c.l.b16 %v526
    %v1581 = vunpack.c.h.b16 %v526
    %v1582 = vunpack.c.l.b16 %v527
    %v1583 = vunpack.c.h.b16 %v527
    %v1584 = vunpack.c.l.b16 %v528
    %v1585 = vunpack.c.h.b16 %v528
    %v1586 = vunpack.c.l.b16 %v529
    %v1587 = vunpack.c.h.b16 %v529
    %v1588 = vunpack.c.l.b16 %v530
    %v1589 = vunpack.c.h.b16 %v530
    %v1590 = vunpack.c.l.b16 %v531
    %v1591 = vunpack.c.h.b16 %v531
    %v1592 = vunpack.c.l.b16 %v532
    %v1593 = vunpack.c.h.b16 %v532
    %v1594 = vunpack.c.l.b16 %v533
    %v1595 = vunpack.c.h.b16 %v533
    %v1596 = vunpack.c.l.b16 %v534
    %v1597 = vunpack.c.h.b16 %v534
    %v1598 = vunpack.c.l.b16 %v535
    %v1599 = vunpack.c.h.b16 %v535
    %v1600 = vunpack.c.l.b16 %v536
    %v1601 = vunpack.c.h.b16 %v536
    %v1602 = vunpack.c.l.b16 %v537
    %v1603 = vunpack.c.h.b16 %v537
    %v1604 = vunpack.c.l.b16 %v538
    %v1605 = vunpack.c.h.b16 %v538
    %v1606 = vunpack.c.l.b16 %v539
    %v1607 = vunpack.c.h.b16 %v539
    %v1608 = vunpack.c.l.b16 %v540
    %v1609 = vunpack.c.h.b16 %v540
    %v1610 = vunpack.c.l.b16 %v541
    %v1611 = vunpack.c.h.b16 %v541
    %v1612 = vunpack.c.l.b16 %v542
    %v1613 = vunpack.c.h.b16 %v542
    %v1614 = vunpack.c.l.b16 %v543
    %v1615 = vunpack.c.h.b16 %v543
    %v1616 = vunpack.c.l.b16 %v544
    %v1617 = vunpack.c.h.b16 %v544
    %v1618 = vunpack.c.l.b16 %v545
    %v1619 = vunpack.c.h.b16 %v545
    %v1620 = vunpack.c.l.b16 %v546
    %v1621 = vunpack.c.h.b16 %v546
    %v1622 = vunpack.c.l.b16 %v547
    %v1623 = vunpack.c.h.b16 %v547
    %v1624 = vunpack.c.l.b16 %v548
    %v1625 = vunpack.c.h.b16 %v548
    %v1626 = vunpack.c.l.b16 %v549
    %v1627 = vunpack.c.h.b16 %v549
    %v1628 = vunpack.c.l.b16 %v550
    %v1629 = vunpack.c.h.b16 %v550
    %v1630 = vunpack.c.l.b16 %v551
    %v1631 = vunpack.c.h.b16 %v551
    %v1632 = vunpack.c.l.b16 %v552
    %v1633 = vunpack.c.h.b16 %v552
    %v1634 = vunpack.c.l.b16 %v553
    %v1635 = vunpack.c.h.b16 %v553
    %v1636 = vunpack.c.l.b16 %v554
    %v1637 = vunpack.c.h.b16 %v554
    %v1638 = vunpack.c.l.b16 %v555
    %v1639 = vunpack.c.h.b16 %v555
    %v1640 = vunpack.c.l.b16 %v556
    %v1641 = vunpack.c.h.b16 %v556
    %v1642 = vunpack.c.l.b16 %v557
    %v1643 = vunpack.c.h.b16 %v557
    %v1644 = vunpack.c.l.b16 %v558
    %v1645 = vunpack.c.h.b16 %v558
    %v1646 = vunpack.c.l.b16 %v559
    %v1647 = vunpack.c.h.b16 %v559
    %v1648 = vunpack.c.l.b16 %v560
    %v1649 = vunpack.c.h.b16 %v560
    %v1650 = vunpack.c.l.b16 %v561
    %v1651 = vunpack.c.h.b16 %v561
    %v1652 = vunpack.c.l.b16 %v562
    %v1653 = vunpack.c.h.b16 %v562
    %v1654 = vunpack.c.l.b16 %v563
    %v1655 = vunpack.c.h.b16 %v563
    %v1656 = vunpack.c.l.b16 %v564
    %v1657 = vunpack.c.h.b16 %v564
    %v1658 = vunpack.c.l.b16 %v565
    %v1659 = vunpack.c.h.b16 %v565
    %v1660 = vunpack.c.l.b16 %v566
    %v1661 = vunpack.c.h.b16 %v566
    %v1662 = vunpack.c.l.b16 %v567
    %v1663 = vunpack.c.h.b16 %v567
    %v1664 = vunpack.c.l.b16 %v568
    %v1665 = vunpack.c.h.b16 %v568
    %v1666 = vunpack.c.l.b16 %v569
    %v1667 = vunpack.c.h.b16 %v569
    %v1668 = vunpack.c.l.b16 %v570
    %v1669 = vunpack.c.h.b16 %v570
    %v1670 = vunpack.c.l.b16 %v571
    %v1671 = vunpack.c.h.b16 %v571
    %v1672 = vunpack.c.l.b16 %v572
    %v1673 = vunpack.c.h.b16 %v572
    %v1674 = vunpack.c.l.b16 %v573
    %v1675 = vunpack.c.h.b16 %v573
    %v1676 = vunpack.c.l.b16 %v574
    %v1677 = vunpack.c.h.b16 %v574
    %v1678 = vunpack.c.l.b16 %v575
    %v1679 = vunpack.c.h.b16 %v575
    %v1680 = vunpack.c.l.b16 %v576
    %v1681 = vunpack.c.h.b16 %v576
    %v1682 = vunpack.c.l.b16 %v577
    %v1683 = vunpack.c.h.b16 %v577
    %v1684 = vunpack.c.l.b16 %v578
    %v1685 = vunpack.c.h.b16 %v578
    %v1686 = vunpack.c.l.b16 %v579
    %v1687 = vunpack.c.h.b16 %v579
    %v1688 = vunpack.c.l.b16 %v580
    %v1689 = vunpack.c.h.b16 %v580
    %v1690 = vunpack.c.l.b16 %v581
    %v1691 = vunpack.c.h.b16 %v581
    %v1692 = vunpack.c.l.b16 %v582
    %v1693 = vunpack.c.h.b16 %v582
    %v1694 = vunpack.c.l.b16 %v583
    %v1695 = vunpack.c.h.b16 %v583
    %v1696 = vunpack.c.l.b16 %v584
    %v1697 = vunpack.c.h.b16 %v584
    %v1698 = vunpack.c.l.b16 %v585
    %v1699 = vunpack.c.h.b16 %v585
    %v1700 = vunpack.c.l.b16 %v586
    %v1701 = vunpack.c.h.b16 %v586
    %v1702 = vunpack.c.l.b16 %v587
    %v1703 = vunpack.c.h.b16 %v587
    %v1704 = vunpack.c.l.b16 %v588
    %v1705 = vunpack.c.h.b16 %v588
    %v1706 = vunpack.c.l.b16 %v589
    %v1707 = vunpack.c.h.b16 %v589
    %v1708 = vunpack.c.l.b16 %v590
    %v1709 = vunpack.c.h.b16 %v590
    %v1710 = vunpack.c.l.b16 %v591
    %v1711 = vunpack.c.h.b16 %v591
    %v1712 = vunpack.c.l.b16 %v592
    %v1713 = vunpack.c.h.b16 %v592
    %v1714 = vunpack.c.l.b16 %v593
    %v1715 = vunpack.c.h.b16 %v593
    %v1716 = vunpack.c.l.b16 %v594
    %v1717 = vunpack.c.h.b16 %v594
    %v1718 = vunpack.c.l.b16 %v595
    %v1719 = vunpack.c.h.b16 %v595
    %v1720 = vunpack.c.l.b16 %v596
    %v1721 = vunpack.c.h.b16 %v596
    %v1722 = vunpack.c.l.b16 %v597
    %v1723 = vunpack.c.h.b16 %v597
    %v1724 = vunpack.c.l.b16 %v598
    %v1725 = vunpack.c.h.b16 %v598
    %v1726 = vunpack.c.l.b16 %v599
    %v1727 = vunpack.c.h.b16 %v599
    %v1728 = vunpack.c.l.b16 %v600
    %v1729 = vunpack.c.h.b16 %v600
    %v1730 = vunpack.c.l.b16 %v601
    %v1731 = vunpack.c.h.b16 %v601
    %v1732 = vunpack.c.l.b16 %v602
    %v1733 = vunpack.c.h.b16 %v602
    %v1734 = vunpack.c.l.b16 %v603
    %v1735 = vunpack.c.h.b16 %v603
    %v1736 = vunpack.c.l.b16 %v604
    %v1737 = vunpack.c.h.b16 %v604
    %v1738 = vunpack.c.l.b16 %v605
    %v1739 = vunpack.c.h.b16 %v605
    %v1740 = vunpack.c.l.b16 %v606
    %v1741 = vunpack.c.h.b16 %v606
    %v1742 = vunpack.c.l.b16 %v607
    %v1743 = vunpack.c.h.b16 %v607
    %v1744 = vunpack.c.l.b16 %v608
    %v1745 = vunpack.c.h.b16 %v608
    %v1746 = vunpack.c.l.b16 %v609
    %v1747 = vunpack.c.h.b16 %v609
    %v1748 = vunpack.c.l.b16 %v610
    %v1749 = vunpack.c.h.b16 %v610
    %v1750 = vunpack.c.l.b16 %v611
    %v1751 = vunpack.c.h.b16 %v611
    %v1752 = vunpack.c.l.b16 %v612
    %v1753 = vunpack.c.h.b16 %v612
    %v1754 = vunpack.c.l.b16 %v613
    %v1755 = vunpack.c.h.b16 %v613
    %v1756 = vunpack.c.l.b16 %v614
    %v1757 = vunpack.c.h.b16 %v614
    %v1758 = vunpack.c.l.b16 %v615
    %v1759 = vunpack.c.h.b16 %v615
    %v1760 = vunpack.c.l.b16 %v616
    %v1761 = vunpack.c.h.b16 %v616
    %v1762 = vunpack.c.l.b16 %v617
    %v1763 = vunpack.c.h.b16 %v617
    %v1764 = vunpack.c.l.b16 %v618
    %v1765 = vunpack.c.h.b16 %v618
    %v1766 = vunpack.c.l.b16 %v619
    %v1767 = vunpack.c.h.b16 %v619
    %v1768 = vunpack.c.l.b16 %v620
    %v1769 = vunpack.c.h.b16 %v620
    %v1770 = vunpack.c.l.b16 %v621
    %v1771 = vunpack.c.h.b16 %v621
    %v1772 = vunpack.c.l.b16 %v622
    %v1773 = vunpack.c.h.b16 %v622
    %v1774 = vunpack.c.l.b16 %v623
    %v1775 = vunpack.c.h.b16 %v623
    %v1776 = vunpack.c.l.b16 %v624
    %v1777 = vunpack.c.h.b16 %v624
    %v1778 = vunpack.c.l.b16 %v625
    %v1779 = vunpack.c.h.b16 %v625
    %v1780 = vunpack.c.l.b16 %v626
    %v1781 = vunpack.c.h.b16 %v626
    %v1782 = vunpack.c.l.b16 %v627
    %v1783 = vunpack.c.h.b16 %v627
    %v1784 = vunpack.c.l.b16 %v628
    %v1785 = vunpack.c.h.b16 %v628
    %v1786 = vunpack.c.l.b16 %v629
    %v1787 = vunpack.c.h.b16 %v629
    %v1788 = vpack.c.b16 %v1022, %v1020
    %v1789 = vpack.c.b16 %v1023, %v1021
    %v1790 = vpack.c.b16 %v1026, %v1024
    %v1791 = vpack.c.b16 %v1027, %v1025
    %v1792 = vpack.c.b16 %v1030, %v1028
    %v1793 = vpack.c.b16 %v1031, %v1029
    %v1794 = vpack.c.b16 %v1034, %v1032
    %v1795 = vpack.c.b16 %v1035, %v1033
    %v1796 = vpack.c.b16 %v1038, %v1036
    %v1797 = vpack.c.b16 %v1039, %v1037
    %v1798 = vpack.c.b16 %v1042, %v1040
    %v1799 = vpack.c.b16 %v1043, %v1041
    %v1800 = vpack.c.b16 %v1046, %v1044
    %v1801 = vpack.c.b16 %v1047, %v1045
    %v1802 = vpack.c.b16 %v1050, %v1048
    %v1803 = vpack.c.b16 %v1051, %v1049
    %v1804 = vpack.c.b16 %v1054, %v1052
    %v1805 = vpack.c.b16 %v1055, %v1053
    %v1806 = vpack.c.b16 %v1058, %v1056
    %v1807 = vpack.c.b16 %v1059, %v1057
    %v1808 = vpack.c.b16 %v1062, %v1060
    %v1809 = vpack.c.b16 %v1063, %v1061
    %v1810 = vpack.c.b16 %v1066, %v1064
    %v1811 = vpack.c.b16 %v1067, %v1065
    %v1812 = vpack.c.b16 %v1070, %v1068
    %v1813 = vpack.c.b16 %v1071, %v1069
    %v1814 = vpack.c.b16 %v1074, %v1072
    %v1815 = vpack.c.b16 %v1075, %v1073
    %v1816 = vpack.c.b16 %v1078, %v1076
    %v1817 = vpack.c.b16 %v1079, %v1077
    %v1818 = vpack.c.b16 %v1082, %v1080
    %v1819 = vpack.c.b16 %v1083, %v1081
    %v1820 = vpack.c.b16 %v1086, %v1084
    %v1821 = vpack.c.b16 %v1087, %v1085
    %v1822 = vpack.c.b16 %v1090, %v1088
    %v1823 = vpack.c.b16 %v1091, %v1089
    %v1824 = vpack.c.b16 %v1094, %v1092
    %v1825 = vpack.c.b16 %v1095, %v1093
    %v1826 = vpack.c.b16 %v1098, %v1096
    %v1827 = vpack.c.b16 %v1099, %v1097
    %v1828 = vpack.c.b16 %v1102, %v1100
    %v1829 = vpack.c.b16 %v1103, %v1101
    %v1830 = vpack.c.b16 %v1106, %v1104
    %v1831 = vpack.c.b16 %v1107, %v1105
    %v1832 = vpack.c.b16 %v1110, %v1108
    %v1833 = vpack.c.b16 %v1111, %v1109
    %v1834 = vpack.c.b16 %v1114, %v1112
    %v1835 = vpack.c.b16 %v1115, %v1113
    %v1836 = vpack.c.b16 %v1118, %v1116
    %v1837 = vpack.c.b16 %v1119, %v1117
    %v1838 = vpack.c.b16 %v1122, %v1120
    %v1839 = vpack.c.b16 %v1123, %v1121
    %v1840 = vpack.c.b16 %v1126, %v1124
    %v1841 = vpack.c.b16 %v1127, %v1125
    %v1842 = vpack.c.b16 %v1130, %v1128
    %v1843 = vpack.c.b16 %v1131, %v1129
    %v1844 = vpack.c.b16 %v1134, %v1132
    %v1845 = vpack.c.b16 %v1135, %v1133
    %v1846 = vpack.c.b16 %v1138, %v1136
    %v1847 = vpack.c.b16 %v1139, %v1137
    %v1848 = vpack.c.b16 %v1142, %v1140
    %v1849 = vpack.c.b16 %v1143, %v1141
    %v1850 = vpack.c.b16 %v1146, %v1144
    %v1851 = vpack.c.b16 %v1147, %v1145
    %v1852 = vpack.c.b16 %v1150, %v1148
    %v1853 = vpack.c.b16 %v1151, %v1149
    %v1854 = vpack.c.b16 %v1154, %v1152
    %v1855 = vpack.c.b16 %v1155, %v1153
    %v1856 = vpack.c.b16 %v1158, %v1156
    %v1857 = vpack.c.b16 %v1159, %v1157
    %v1858 = vpack.c.b16 %v1162, %v1160
    %v1859 = vpack.c.b16 %v1163, %v1161
    %v1860 = vpack.c.b16 %v1166, %v1164
    %v1861 = vpack.c.b16 %v1167, %v1165
    %v1862 = vpack.c.b16 %v1170, %v1168
    %v1863 = vpack.c.b16 %v1171, %v1169
    %v1864 = vpack.c.b16 %v1174, %v1172
    %v1865 = vpack.c.b16 %v1175, %v1173
    %v1866 = vpack.c.b16 %v1178, %v1176
    %v1867 = vpack.c.b16 %v1179, %v1177
    %v1868 = vpack.c.b16 %v1182, %v1180
    %v1869 = vpack.c.b16 %v1183, %v1181
    %v1870 = vpack.c.b16 %v1186, %v1184
    %v1871 = vpack.c.b16 %v1187, %v1185
    %v1872 = vpack.c.b16 %v1190, %v1188
    %v1873 = vpack.c.b16 %v1191, %v1189
    %v1874 = vpack.c.b16 %v1194, %v1192
    %v1875 = vpack.c.b16 %v1195, %v1193
    %v1876 = vpack.c.b16 %v1198, %v1196
    %v1877 = vpack.c.b16 %v1199, %v1197
    %v1878 = vpack.c.b16 %v1202, %v1200
    %v1879 = vpack.c.b16 %v1203, %v1201
    %v1880 = vpack.c.b16 %v1206, %v1204
    %v1881 = vpack.c.b16 %v1207, %v1205
    %v1882 = vpack.c.b16 %v1210, %v1208
    %v1883 = vpack.c.b16 %v1211, %v1209
    %v1884 = vpack.c.b16 %v1214, %v1212
    %v1885 = vpack.c.b16 %v1215, %v1213
    %v1886 = vpack.c.b16 %v1218, %v1216
    %v1887 = vpack.c.b16 %v1219, %v1217
    %v1888 = vpack.c.b16 %v1222, %v1220
    %v1889 = vpack.c.b16 %v1223, %v1221
    %v1890 = vpack.c.b16 %v1226, %v1224
    %v1891 = vpack.c.b16 %v1227, %v1225
    %v1892 = vpack.c.b16 %v1230, %v1228
    %v1893 = vpack.c.b16 %v1231, %v1229
    %v1894 = vpack.c.b16 %v1234, %v1232
    %v1895 = vpack.c.b16 %v1235, %v1233
    %v1896 = vpack.c.b16 %v1238, %v1236
    %v1897 = vpack.c.b16 %v1239, %v1237
    %v1898 = vpack.c.b16 %v1242, %v1240
    %v1899 = vpack.c.b16 %v1243, %v1241
    %v1900 = vpack.c.b16 %v1246, %v1244
    %v1901 = vpack.c.b16 %v1247, %v1245
    %v1902 = vpack.c.b16 %v1250, %v1248
    %v1903 = vpack.c.b16 %v1251, %v1249
    %v1904 = vpack.c.b16 %v1254, %v1252
    %v1905 = vpack.c.b16 %v1255, %v1253
    %v1906 = vpack.c.b16 %v1258, %v1256
    %v1907 = vpack.c.b16 %v1259, %v1257
    %v1908 = vpack.c.b16 %v1262, %v1260
    %v1909 = vpack.c.b16 %v1263, %v1261
    %v1910 = vpack.c.b16 %v1266, %v1264
    %v1911 = vpack.c.b16 %v1267, %v1265
    %v1912 = vpack.c.b16 %v1270, %v1268
    %v1913 = vpack.c.b16 %v1271, %v1269
    %v1914 = vpack.c.b16 %v1274, %v1272
    %v1915 = vpack.c.b16 %v1275, %v1273
    %v1916 = vpack.c.b16 %v1278, %v1276
    %v1917 = vpack.c.b16 %v1279, %v1277
    %v1918 = vpack.c.b16 %v1282, %v1280
    %v1919 = vpack.c.b16 %v1283, %v1281
    %v1920 = vpack.c.b16 %v1286, %v1284
    %v1921 = vpack.c.b16 %v1287, %v1285
    %v1922 = vpack.c.b16 %v1290, %v1288
    %v1923 = vpack.c.b16 %v1291, %v1289
    %v1924 = vpack.c.b16 %v1294, %v1292
    %v1925 = vpack.c.b16 %v1295, %v1293
    %v1926 = vpack.c.b16 %v1298, %v1296
    %v1927 = vpack.c.b16 %v1299, %v1297
    %v1928 = vpack.c.b16 %v1302, %v1300
    %v1929 = vpack.c.b16 %v1303, %v1301
    %v1930 = vpack.c.b16 %v1306, %v1304
    %v1931 = vpack.c.b16 %v1307, %v1305
    %v1932 = vpack.c.b16 %v1310, %v1308
    %v1933 = vpack.c.b16 %v1311, %v1309
    %v1934 = vpack.c.b16 %v1314, %v1312
    %v1935 = vpack.c.b16 %v1315, %v1313
    %v1936 = vpack.c.b16 %v1318, %v1316
    %v1937 = vpack.c.b16 %v1319, %v1317
    %v1938 = vpack.c.b16 %v1322, %v1320
    %v1939 = vpack.c.b16 %v1323, %v1321
    %v1940 = vpack.c.b16 %v1326, %v1324
    %v1941 = vpack.c.b16 %v1327, %v1325
    %v1942 = vpack.c.b16 %v1330, %v1328
    %v1943 = vpack.c.b16 %v1331, %v1329
    %v1944 = vpack.c.b16 %v1334, %v1332
    %v1945 = vpack.c.b16 %v1335, %v1333
    %v1946 = vpack.c.b16 %v1338, %v1336
    %v1947 = vpack.c.b16 %v1339, %v1337
    %v1948 = vpack.c.b16 %v1342, %v1340
    %v1949 = vpack.c.b16 %v1343, %v1341
    %v1950 = vpack.c.b16 %v1346, %v1344
    %v1951 = vpack.c.b16 %v1347, %v1345
    %v1952 = vpack.c.b16 %v1350, %v1348
    %v1953 = vpack.c.b16 %v1351, %v1349
    %v1954 = vpack.c.b16 %v1354, %v1352
    %v1955 = vpack.c.b16 %v1355, %v1353
    %v1956 = vpack.c.b16 %v1358, %v1356
    %v1957 = vpack.c.b16 %v1359, %v1357
    %v1958 = vpack.c.b16 %v1362, %v1360
    %v1959 = vpack.c.b16 %v1363, %v1361
    %v1960 = vpack.c.b16 %v1366, %v1364
    %v1961 = vpack.c.b16 %v1367, %v1365
    %v1962 = vpack.c.b16 %v1370, %v1368
    %v1963 = vpack.c.b16 %v1371, %v1369
    %v1964 = vpack.c.b16 %v1374, %v1372
    %v1965 = vpack.c.b16 %v1375, %v1373
    %v1966 = vpack.c.b16 %v1378, %v1376
    %v1967 = vpack.c.b16 %v1379, %v1377
    %v1968 = vpack.c.b16 %v1382, %v1380
    %v1969 = vpack.c.b16 %v1383, %v1381
    %v1970 = vpack.c.b16 %v1386, %v1384
    %v1971 = vpack.c.b16 %v1387, %v1385
    %v1972 = vpack.c.b16 %v1390, %v1388
    %v1973 = vpack.c.b16 %v1391, %v1389
    %v1974 = vpack.c.b16 %v1394, %v1392
    %v1975 = vpack.c.b16 %v1395, %v1393
    %v1976 = vpack.c.b16 %v1398, %v1396
    %v1977 = vpack.c.b16 %v1399, %v1397
    %v1978 = vpack.c.b16 %v1402, %v1400
    %v1979 = vpack.c.b16 %v1403, %v1401
    %v1980 = vpack.c.b16 %v1406, %v1404
    %v1981 = vpack.c.b16 %v1407, %v1405
    %v1982 = vpack.c.b16 %v1410, %v1408
    %v1983 = vpack.c.b16 %v1411, %v1409
    %v1984 = vpack.c.b16 %v1414, %v1412
    %v1985 = vpack.c.b16 %v1415, %v1413
    %v1986 = vpack.c.b16 %v1418, %v1416
    %v1987 = vpack.c.b16 %v1419, %v1417
    %v1988 = vpack.c.b16 %v1422, %v1420
    %v1989 = vpack.c.b16 %v1423, %v1421
    %v1990 = vpack.c.b16 %v1426, %v1424
    %v1991 = vpack.c.b16 %v1427, %v1425
    %v1992 = vpack.c.b16 %v1430, %v1428
    %v1993 = vpack.c.b16 %v1431, %v1429
    %v1994 = vpack.c.b16 %v1434, %v1432
    %v1995 = vpack.c.b16 %v1435, %v1433
    %v1996 = vpack.c.b16 %v1438, %v1436
    %v1997 = vpack.c.b16 %v1439, %v1437
    %v1998 = vpack.c.b16 %v1442, %v1440
    %v1999 = vpack.c.b16 %v1443, %v1441
    %v2000 = vpack.c.b16 %v1446, %v1444
    %v2001 = vpack.c.b16 %v1447, %v1445
    %v2002 = vpack.c.b16 %v1450, %v1448
    %v2003 = vpack.c.b16 %v1451, %v1449
    %v2004 = vpack.c.b16 %v1454, %v1452
    %v2005 = vpack.c.b16 %v1455, %v1453
    %v2006 = vpack.c.b16 %v1458, %v1456
    %v2007 = vpack.c.b16 %v1459, %v1457
    %v2008 = vpack.c.b16 %v1462, %v1460
    %v2009 = vpack.c.b16 %v1463, %v1461
    %v2010 = vpack.c.b16 %v1466, %v1464
    %v2011 = vpack.c.b16 %v1467, %v1465
    %v2012 = vpack.c.b16 %v1470, %v1468
    %v2013 = vpack.c.b16 %v1471, %v1469
    %v2014 = vpack.c.b16 %v1474, %v1472
    %v2015 = vpack.c.b16 %v1475, %v1473
    %v2016 = vpack.c.b16 %v1478, %v1476
    %v2017 = vpack.c.b16 %v1479, %v1477
    %v2018 = vpack.c.b16 %v1482, %v1480
    %v2019 = vpack.c.b16 %v1483, %v1481
    %v2020 = vpack.c.b16 %v1486, %v1484
    %v2021 = vpack.c.b16 %v1487, %v1485
    %v2022 = vpack.c.b16 %v1490, %v1488
    %v2023 = vpack.c.b16 %v1491, %v1489
    %v2024 = vpack.c.b16 %v1494, %v1492
    %v2025 = vpack.c.b16 %v1495, %v1493
    %v2026 = vpack.c.b16 %v1498, %v1496
    %v2027 = vpack.c.b16 %v1499, %v1497
    %v2028 = vpack.c.b16 %v1502, %v1500
    %v2029 = vpack.c.b16 %v1503, %v1501
    %v2030 = vpack.c.b16 %v1506, %v1504
    %v2031 = vpack.c.b16 %v1507, %v1505
    %v2032 = vpack.c.b16 %v1510, %v1508
    %v2033 = vpack.c.b16 %v1511, %v1509
    %v2034 = vpack.c.b16 %v1514, %v1512
    %v2035 = vpack.c.b16 %v1515, %v1513
    %v2036 = vpack.c.b16 %v1518, %v1516
    %v2037 = vpack.c.b16 %v1519, %v1517
    %v2038 = vpack.c.b16 %v1522, %v1520
    %v2039 = vpack.c.b16 %v1523, %v1521
    %v2040 = vpack.c.b16 %v1526, %v1524
    %v2041 = vpack.c.b16 %v1527, %v1525
    %v2042 = vpack.c.b16 %v1530, %v1528
    %v2043 = vpack.c.b16 %v1531, %v1529
    %v2044 = vpack.c.b16 %v1534, %v1532
    %v2045 = vpack.c.b16 %v1535, %v1533
    %v2046 = vpack.c.b16 %v1538, %v1536
    %v2047 = vpack.c.b16 %v1539, %v1537
    %v2048 = vpack.c.b16 %v1542, %v1540
    %v2049 = vpack.c.b16 %v1543, %v1541
    %v2050 = vpack.c.b16 %v1546, %v1544
    %v2051 = vpack.c.b16 %v1547, %v1545
    %v2052 = vpack.c.b16 %v1550, %v1548
    %v2053 = vpack.c.b16 %v1551, %v1549
    %v2054 = vpack.c.b16 %v1554, %v1552
    %v2055 = vpack.c.b16 %v1555, %v1553
    %v2056 = vpack.c.b16 %v1558, %v1556
    %v2057 = vpack.c.b16 %v1559, %v1557
    %v2058 = vpack.c.b16 %v1562, %v1560
    %v2059 = vpack.c.b16 %v1563, %v1561
    %v2060 = vpack.c.b16 %v1566, %v1564
    %v2061 = vpack.c.b16 %v1567, %v1565
    %v2062 = vpack.c.b16 %v1570, %v1568
    %v2063 = vpack.c.b16 %v1571, %v1569
    %v2064 = vpack.c.b16 %v1574, %v1572
    %v2065 = vpack.c.b16 %v1575, %v1573
    %v2066 = vpack.c.b16 %v1578, %v1576
    %v2067 = vpack.c.b16 %v1579, %v1577
    %v2068 = vpack.c.b16 %v1582, %v1580
    %v2069 = vpack.c.b16 %v1583, %v1581
    %v2070 = vpack.c.b16 %v1586, %v1584
    %v2071 = vpack.c.b16 %v1587, %v1585
    %v2072 = vpack.c.b16 %v1590, %v1588
    %v2073 = vpack.c.b16 %v1591, %v1589
    %v2074 = vpack.c.b16 %v1594, %v1592
    %v2075 = vpack.c.b16 %v1595, %v1593
    %v2076 = vpack.c.b16 %v1598, %v1596
    %v2077 = vpack.c.b16 %v1599, %v1597
    %v2078 = vpack.c.b16 %v1602, %v1600
    %v2079 = vpack.c.b16 %v1603, %v1601
    %v2080 = vpack.c.b16 %v1606, %v1604
    %v2081 = vpack.c.b16 %v1607, %v1605
    %v2082 = vpack.c.b16 %v1610, %v1608
    %v2083 = vpack.c.b16 %v1611, %v1609
    %v2084 = vpack.c.b16 %v1614, %v1612
    %v2085 = vpack.c.b16 %v1615, %v1613
    %v2086 = vpack.c.b16 %v1618, %v1616
    %v2087 = vpack.c.b16 %v1619, %v1617
    %v2088 = vpack.c.b16 %v1622, %v1620
    %v2089 = vpack.c.b16 %v1623, %v1621
    %v2090 = vpack.c.b16 %v1626, %v1624
    %v2091 = vpack.c.b16 %v1627, %v1625
    %v2092 = vpack.c.b16 %v1630, %v1628
    %v2093 = vpack.c.b16 %v1631, %v1629
    %v2094 = vpack.c.b16 %v1634, %v1632
    %v2095 = vpack.c.b16 %v1635, %v1633
    %v2096 = vpack.c.b16 %v1638, %v1636
    %v2097 = vpack.c.b16 %v1639, %v1637
    %v2098 = vpack.c.b16 %v1642, %v1640
    %v2099 = vpack.c.b16 %v1643, %v1641
    %v2100 = vpack.c.b16 %v1646, %v1644
    %v2101 = vpack.c.b16 %v1647, %v1645
    %v2102 = vpack.c.b16 %v1650, %v1648
    %v2103 = vpack.c.b16 %v1651, %v1649
    %v2104 = vpack.c.b16 %v1654, %v1652
    %v2105 = vpack.c.b16 %v1655, %v1653
    %v2106 = vpack.c.b16 %v1658, %v1656
    %v2107 = vpack.c.b16 %v1659, %v1657
    %v2108 = vpack.c.b16 %v1662, %v1660
    %v2109 = vpack.c.b16 %v1663, %v1661
    %v2110 = vpack.c.b16 %v1666, %v1664
    %v2111 = vpack.c.b16 %v1667, %v1665
    %v2112 = vpack.c.b16 %v1670, %v1668
    %v2113 = vpack.c.b16 %v1671, %v1669
    %v2114 = vpack.c.b16 %v1674, %v1672
    %v2115 = vpack.c.b16 %v1675, %v1673
    %v2116 = vpack.c.b16 %v1678, %v1676
    %v2117 = vpack.c.b16 %v1679, %v1677
    %v2118 = vpack.c.b16 %v1682, %v1680
    %v2119 = vpack.c.b16 %v1683, %v1681
    %v2120 = vpack.c.b16 %v1686, %v1684
    %v2121 = vpack.c.b16 %v1687, %v1685
    %v2122 = vpack.c.b16 %v1690, %v1688
    %v2123 = vpack.c.b16 %v1691, %v1689
    %v2124 = vpack.c.b16 %v1694, %v1692
    %v2125 = vpack.c.b16 %v1695, %v1693
    %v2126 = vpack.c.b16 %v1698, %v1696
    %v2127 = vpack.c.b16 %v1699, %v1697
    %v2128 = vpack.c.b16 %v1702, %v1700
    %v2129 = vpack.c.b16 %v1703, %v1701
    %v2130 = vpack.c.b16 %v1706, %v1704
    %v2131 = vpack.c.b16 %v1707, %v1705
    %v2132 = vpack.c.b16 %v1710, %v1708
    %v2133 = vpack.c.b16 %v1711, %v1709
    %v2134 = vpack.c.b16 %v1714, %v1712
    %v2135 = vpack.c.b16 %v1715, %v1713
    %v2136 = vpack.c.b16 %v1718, %v1716
    %v2137 = vpack.c.b16 %v1719, %v1717
    %v2138 = vpack.c.b16 %v1722, %v1720
    %v2139 = vpack.c.b16 %v1723, %v1721
    %v2140 = vpack.c.b16 %v1726, %v1724
    %v2141 = vpack.c.b16 %v1727, %v1725
    %v2142 = vpack.c.b16 %v1730, %v1728
    %v2143 = vpack.c.b16 %v1731, %v1729
    %v2144 = vpack.c.b16 %v1734, %v1732
    %v2145 = vpack.c.b16 %v1735, %v1733
    %v2146 = vpack.c.b16 %v1738, %v1736
    %v2147 = vpack.c.b16 %v1739, %v1737
    %v2148 = vpack.c.b16 %v1742, %v1740
    %v2149 = vpack.c.b16 %v1743, %v1741
    %v2150 = vpack.c.b16 %v1746, %v1744
    %v2151 = vpack.c.b16 %v1747, %v1745
    %v2152 = vpack.c.b16 %v1750, %v1748
    %v2153 = vpack.c.b16 %v1751, %v1749
    %v2154 = vpack.c.b16 %v1754, %v1752
    %v2155 = vpack.c.b16 %v1755, %v1753
    %v2156 = vpack.c.b16 %v1758, %v1756
    %v2157 = vpack.c.b16 %v1759, %v1757
    %v2158 = vpack.c.b16 %v1762, %v1760
    %v2159 = vpack.c.b16 %v1763, %v1761
    %v2160 = vpack.c.b16 %v1766, %v1764
    %v2161 = vpack.c.b16 %v1767, %v1765
    %v2162 = vpack.c.b16 %v1770, %v1768
    %v2163 = vpack.c.b16 %v1771, %v1769
    %v2164 = vpack.c.b16 %v1774, %v1772
    %v2165 = vpack.c.b16 %v1775, %v1773
    %v2166 = vpack.c.b16 %v1778, %v1776
    %v2167 = vpack.c.b16 %v1779, %v1777
    %v2168 = vpack.c.b16 %v1782, %v1780
    %v2169 = vpack.c.b16 %v1783, %v1781
    %v2170 = vpack.c.b16 %v1786, %v1784
    %v2171 = vpack.c.b16 %v1787, %v1785
    %2556 = vmatpush.bf16.msra.mxu0 %v1802
    %2557 = vmatpush.bf16.msra.mxu0 %v1800
    %2558 = vmatpush.bf16.msra.mxu0 %v1798
    %2559 = vmatpush.bf16.msra.mxu0 %v1796
    %2560 = vmatpush.bf16.msra.mxu0 %v1794
    %2561 = vmatpush.bf16.msra.mxu0 %v1792
    %2562 = vmatpush.bf16.msra.mxu0 %v1790
    %2563 = vmatpush.bf16.msra.mxu0 %v1788
    %2564 = vmatmul.bf16.gmra.mxu0 %v222
    %v2565 = vpop.f32.mrf.mxu0
    %v2566 = vadd.f32 %v632, %v2565
    %v2567 = vpop.f32.mrf.mxu0
    %2568 = vdwg.mxu0
    %2569 = vmatpush.bf16.msra.mxu0 %v1818
    %2570 = vmatpush.bf16.msra.mxu0 %v1816
    %2571 = vmatpush.bf16.msra.mxu0 %v1814
    %2572 = vmatpush.bf16.msra.mxu0 %v1812
    %2573 = vmatpush.bf16.msra.mxu0 %v1810
    %2574 = vmatpush.bf16.msra.mxu0 %v1808
    %2575 = vmatpush.bf16.msra.mxu0 %v1806
    %2576 = vmatpush.bf16.msra.mxu0 %v1804
    %2577 = vmatmul.bf16.gmra.mxu0 %v223
    %v2578 = vpop.f32.mrf.mxu0
    %v2579 = vadd.f32 %v2566, %v2578
    %v2580 = vpop.f32.mrf.mxu0
    %2581 = vdwg.mxu0
    %2582 = vmatpush.bf16.msra.mxu0 %v1834
    %2583 = vmatpush.bf16.msra.mxu0 %v1832
    %2584 = vmatpush.bf16.msra.mxu0 %v1830
    %2585 = vmatpush.bf16.msra.mxu0 %v1828
    %2586 = vmatpush.bf16.msra.mxu0 %v1826
    %2587 = vmatpush.bf16.msra.mxu0 %v1824
    %2588 = vmatpush.bf16.msra.mxu0 %v1822
    %2589 = vmatpush.bf16.msra.mxu0 %v1820
    %2590 = vmatmul.bf16.gmra.mxu0 %v224
    %v2591 = vpop.f32.mrf.mxu0
    %v2592 = vadd.f32 %v2579, %v2591
    %v2593 = vpop.f32.mrf.mxu0
    %2594 = vdwg.mxu0
    %2595 = vmatpush.bf16.msra.mxu0 %v1850
    %2596 = vmatpush.bf16.msra.mxu0 %v1848
    %2597 = vmatpush.bf16.msra.mxu0 %v1846
    %2598 = vmatpush.bf16.msra.mxu0 %v1844
    %2599 = vmatpush.bf16.msra.mxu0 %v1842
    %2600 = vmatpush.bf16.msra.mxu0 %v1840
    %2601 = vmatpush.bf16.msra.mxu0 %v1838
    %2602 = vmatpush.bf16.msra.mxu0 %v1836
    %2603 = vmatmul.bf16.gmra.mxu0 %v225
    %v2604 = vpop.f32.mrf.mxu0
    %v2605 = vadd.f32 %v2592, %v2604
    %v2606 = vpop.f32.mrf.mxu0
    %2607 = vdwg.mxu0
    %2608 = vmatpush.bf16.msra.mxu0 %v1866
    %2609 = vmatpush.bf16.msra.mxu0 %v1864
    %2610 = vmatpush.bf16.msra.mxu0 %v1862
    %2611 = vmatpush.bf16.msra.mxu0 %v1860
    %2612 = vmatpush.bf16.msra.mxu0 %v1858
    %2613 = vmatpush.bf16.msra.mxu0 %v1856
    %2614 = vmatpush.bf16.msra.mxu0 %v1854
    %2615 = vmatpush.bf16.msra.mxu0 %v1852
    %2616 = vmatmul.bf16.gmra.mxu0 %v226
    %v2617 = vpop.f32.mrf.mxu0
    %v2618 = vadd.f32 %v2605, %v2617
    %v2619 = vpop.f32.mrf.mxu0
    %2620 = vdwg.mxu0
    %2621 = vmatpush.bf16.msra.mxu0 %v1882
    %2622 = vmatpush.bf16.msra.mxu0 %v1880
    %2623 = vmatpush.bf16.msra.mxu0 %v1878
    %2624 = vmatpush.bf16.msra.mxu0 %v1876
    %2625 = vmatpush.bf16.msra.mxu0 %v1874
    %2626 = vmatpush.bf16.msra.mxu0 %v1872
    %2627 = vmatpush.bf16.msra.mxu0 %v1870
    %2628 = vmatpush.bf16.msra.mxu0 %v1868
    %2629 = vmatmul.bf16.gmra.mxu0 %v227
    %v2630 = vpop.f32.mrf.mxu0
    %v2631 = vadd.f32 %v2618, %v2630
    %v2632 = vpop.f32.mrf.mxu0
    %2633 = vdwg.mxu0
    %2634 = vmatpush.bf16.msra.mxu0 %v1898
    %2635 = vmatpush.bf16.msra.mxu0 %v1896
    %2636 = vmatpush.bf16.msra.mxu0 %v1894
    %2637 = vmatpush.bf16.msra.mxu0 %v1892
    %2638 = vmatpush.bf16.msra.mxu0 %v1890
    %2639 = vmatpush.bf16.msra.mxu0 %v1888
    %2640 = vmatpush.bf16.msra.mxu0 %v1886
    %2641 = vmatpush.bf16.msra.mxu0 %v1884
    %2642 = vmatmul.bf16.gmra.mxu0 %v228
    %v2643 = vpop.f32.mrf.mxu0
    %v2644 = vadd.f32 %v2631, %v2643
    %v2645 = vpop.f32.mrf.mxu0
    %2646 = vdwg.mxu0
    %2647 = vmatpush.bf16.msra.mxu0 %v1914
    %2648 = vmatpush.bf16.msra.mxu0 %v1912
    %2649 = vmatpush.bf16.msra.mxu0 %v1910
    %2650 = vmatpush.bf16.msra.mxu0 %v1908
    %2651 = vmatpush.bf16.msra.mxu0 %v1906
    %2652 = vmatpush.bf16.msra.mxu0 %v1904
    %2653 = vmatpush.bf16.msra.mxu0 %v1902
    %2654 = vmatpush.bf16.msra.mxu0 %v1900
    %2655 = vmatmul.bf16.gmra.mxu0 %v229
    %v2656 = vpop.f32.mrf.mxu0
    %v2657 = vadd.f32 %v2644, %v2656
    %v2658 = vpop.f32.mrf.mxu0
    %2659 = vdwg.mxu0
    %2660 = vmatpush.bf16.msra.mxu0 %v1930
    %2661 = vmatpush.bf16.msra.mxu0 %v1928
    %2662 = vmatpush.bf16.msra.mxu0 %v1926
    %2663 = vmatpush.bf16.msra.mxu0 %v1924
    %2664 = vmatpush.bf16.msra.mxu0 %v1922
    %2665 = vmatpush.bf16.msra.mxu0 %v1920
    %2666 = vmatpush.bf16.msra.mxu0 %v1918
    %2667 = vmatpush.bf16.msra.mxu0 %v1916
    %2668 = vmatmul.bf16.gmra.mxu0 %v230
    %v2669 = vpop.f32.mrf.mxu0
    %v2670 = vadd.f32 %v2657, %v2669
    %v2671 = vpop.f32.mrf.mxu0
    %2672 = vdwg.mxu0
    %2673 = vmatpush.bf16.msra.mxu0 %v1946
    %2674 = vmatpush.bf16.msra.mxu0 %v1944
    %2675 = vmatpush.bf16.msra.mxu0 %v1942
    %2676 = vmatpush.bf16.msra.mxu0 %v1940
    %2677 = vmatpush.bf16.msra.mxu0 %v1938
    %2678 = vmatpush.bf16.msra.mxu0 %v1936
    %2679 = vmatpush.bf16.msra.mxu0 %v1934
    %2680 = vmatpush.bf16.msra.mxu0 %v1932
    %2681 = vmatmul.bf16.gmra.mxu0 %v231
    %v2682 = vpop.f32.mrf.mxu0
    %v2683 = vadd.f32 %v2670, %v2682
    %v2684 = vpop.f32.mrf.mxu0
    %2685 = vdwg.mxu0
    %2686 = vmatpush.bf16.msra.mxu0 %v1962
    %2687 = vmatpush.bf16.msra.mxu0 %v1960
    %2688 = vmatpush.bf16.msra.mxu0 %v1958
    %2689 = vmatpush.bf16.msra.mxu0 %v1956
    %2690 = vmatpush.bf16.msra.mxu0 %v1954
    %2691 = vmatpush.bf16.msra.mxu0 %v1952
    %2692 = vmatpush.bf16.msra.mxu0 %v1950
    %2693 = vmatpush.bf16.msra.mxu0 %v1948
    %2694 = vmatmul.bf16.gmra.mxu0 %v232
    %v2695 = vpop.f32.mrf.mxu0
    %v2696 = vadd.f32 %v2683, %v2695
    %v2697 = vpop.f32.mrf.mxu0
    %2698 = vdwg.mxu0
    %2699 = vmatpush.bf16.msra.mxu0 %v1978
    %2700 = vmatpush.bf16.msra.mxu0 %v1976
    %2701 = vmatpush.bf16.msra.mxu0 %v1974
    %2702 = vmatpush.bf16.msra.mxu0 %v1972
    %2703 = vmatpush.bf16.msra.mxu0 %v1970
    %2704 = vmatpush.bf16.msra.mxu0 %v1968
    %2705 = vmatpush.bf16.msra.mxu0 %v1966
    %2706 = vmatpush.bf16.msra.mxu0 %v1964
    %2707 = vmatmul.bf16.gmra.mxu0 %v233
    %v2708 = vpop.f32.mrf.mxu0
    %v2709 = vadd.f32 %v2696, %v2708
    %v2710 = vpop.f32.mrf.mxu0
    %2711 = vdwg.mxu0
    %2712 = vmatpush.bf16.msra.mxu0 %v1994
    %2713 = vmatpush.bf16.msra.mxu0 %v1992
    %2714 = vmatpush.bf16.msra.mxu0 %v1990
    %2715 = vmatpush.bf16.msra.mxu0 %v1988
    %2716 = vmatpush.bf16.msra.mxu0 %v1986
    %2717 = vmatpush.bf16.msra.mxu0 %v1984
    %2718 = vmatpush.bf16.msra.mxu0 %v1982
    %2719 = vmatpush.bf16.msra.mxu0 %v1980
    %2720 = vmatmul.bf16.gmra.mxu0 %v234
    %v2721 = vpop.f32.mrf.mxu0
    %v2722 = vadd.f32 %v2709, %v2721
    %v2723 = vpop.f32.mrf.mxu0
    %2724 = vdwg.mxu0
    %2725 = vmatpush.bf16.msra.mxu0 %v2010
    %2726 = vmatpush.bf16.msra.mxu0 %v2008
    %2727 = vmatpush.bf16.msra.mxu0 %v2006
    %2728 = vmatpush.bf16.msra.mxu0 %v2004
    %2729 = vmatpush.bf16.msra.mxu0 %v2002
    %2730 = vmatpush.bf16.msra.mxu0 %v2000
    %2731 = vmatpush.bf16.msra.mxu0 %v1998
    %2732 = vmatpush.bf16.msra.mxu0 %v1996
    %2733 = vmatmul.bf16.gmra.mxu0 %v235
    %v2734 = vpop.f32.mrf.mxu0
    %v2735 = vadd.f32 %v2722, %v2734
    %v2736 = vpop.f32.mrf.mxu0
    %2737 = vdwg.mxu0
    %2738 = vmatpush.bf16.msra.mxu0 %v2026
    %2739 = vmatpush.bf16.msra.mxu0 %v2024
    %2740 = vmatpush.bf16.msra.mxu0 %v2022
    %2741 = vmatpush.bf16.msra.mxu0 %v2020
    %2742 = vmatpush.bf16.msra.mxu0 %v2018
    %2743 = vmatpush.bf16.msra.mxu0 %v2016
    %2744 = vmatpush.bf16.msra.mxu0 %v2014
    %2745 = vmatpush.bf16.msra.mxu0 %v2012
    %2746 = vmatmul.bf16.gmra.mxu0 %v236
    %v2747 = vpop.f32.mrf.mxu0
    %v2748 = vadd.f32 %v2735, %v2747
    %v2749 = vpop.f32.mrf.mxu0
    %2750 = vdwg.mxu0
    %2751 = vmatpush.bf16.msra.mxu0 %v2042
    %2752 = vmatpush.bf16.msra.mxu0 %v2040
    %2753 = vmatpush.bf16.msra.mxu0 %v2038
    %2754 = vmatpush.bf16.msra.mxu0 %v2036
    %2755 = vmatpush.bf16.msra.mxu0 %v2034
    %2756 = vmatpush.bf16.msra.mxu0 %v2032
    %2757 = vmatpush.bf16.msra.mxu0 %v2030
    %2758 = vmatpush.bf16.msra.mxu0 %v2028
    %2759 = vmatmul.bf16.gmra.mxu0 %v237
    %v2760 = vpop.f32.mrf.mxu0
    %v2761 = vadd.f32 %v2748, %v2760
    %v2762 = vpop.f32.mrf.mxu0
    %2763 = vdwg.mxu0
    %2764 = vmatpush.bf16.msra.mxu0 %v2058
    %2765 = vmatpush.bf16.msra.mxu0 %v2056
    %2766 = vmatpush.bf16.msra.mxu0 %v2054
    %2767 = vmatpush.bf16.msra.mxu0 %v2052
    %2768 = vmatpush.bf16.msra.mxu0 %v2050
    %2769 = vmatpush.bf16.msra.mxu0 %v2048
    %2770 = vmatpush.bf16.msra.mxu0 %v2046
    %2771 = vmatpush.bf16.msra.mxu0 %v2044
    %2772 = vmatmul.bf16.gmra.mxu0 %v238
    %v2773 = vpop.f32.mrf.mxu0
    %v2774 = vadd.f32 %v2761, %v2773
    %v2775 = vpop.f32.mrf.mxu0
    %2776 = vdwg.mxu0
    %2777 = vmatpush.bf16.msra.mxu0 %v2074
    %2778 = vmatpush.bf16.msra.mxu0 %v2072
    %2779 = vmatpush.bf16.msra.mxu0 %v2070
    %2780 = vmatpush.bf16.msra.mxu0 %v2068
    %2781 = vmatpush.bf16.msra.mxu0 %v2066
    %2782 = vmatpush.bf16.msra.mxu0 %v2064
    %2783 = vmatpush.bf16.msra.mxu0 %v2062
    %2784 = vmatpush.bf16.msra.mxu0 %v2060
    %2785 = vmatmul.bf16.gmra.mxu0 %v239
    %v2786 = vpop.f32.mrf.mxu0
    %v2787 = vadd.f32 %v2774, %v2786
    %v2788 = vpop.f32.mrf.mxu0
    %2789 = vdwg.mxu0
    %2790 = vmatpush.bf16.msra.mxu0 %v2090
    %2791 = vmatpush.bf16.msra.mxu0 %v2088
    %2792 = vmatpush.bf16.msra.mxu0 %v2086
    %2793 = vmatpush.bf16.msra.mxu0 %v2084
    %2794 = vmatpush.bf16.msra.mxu0 %v2082
    %2795 = vmatpush.bf16.msra.mxu0 %v2080
    %2796 = vmatpush.bf16.msra.mxu0 %v2078
    %2797 = vmatpush.bf16.msra.mxu0 %v2076
    %2798 = vmatmul.bf16.gmra.mxu0 %v240
    %v2799 = vpop.f32.mrf.mxu0
    %v2800 = vadd.f32 %v2787, %v2799
    %v2801 = vpop.f32.mrf.mxu0
    %2802 = vdwg.mxu0
    %2803 = vmatpush.bf16.msra.mxu0 %v2106
    %2804 = vmatpush.bf16.msra.mxu0 %v2104
    %2805 = vmatpush.bf16.msra.mxu0 %v2102
    %2806 = vmatpush.bf16.msra.mxu0 %v2100
    %2807 = vmatpush.bf16.msra.mxu0 %v2098
    %2808 = vmatpush.bf16.msra.mxu0 %v2096
    %2809 = vmatpush.bf16.msra.mxu0 %v2094
    %2810 = vmatpush.bf16.msra.mxu0 %v2092
    %2811 = vmatmul.bf16.gmra.mxu0 %v241
    %v2812 = vpop.f32.mrf.mxu0
    %v2813 = vadd.f32 %v2800, %v2812
    %v2814 = vpop.f32.mrf.mxu0
    %2815 = vdwg.mxu0
    %2816 = vmatpush.bf16.msra.mxu0 %v2122
    %2817 = vmatpush.bf16.msra.mxu0 %v2120
    %2818 = vmatpush.bf16.msra.mxu0 %v2118
    %2819 = vmatpush.bf16.msra.mxu0 %v2116
    %2820 = vmatpush.bf16.msra.mxu0 %v2114
    %2821 = vmatpush.bf16.msra.mxu0 %v2112
    %2822 = vmatpush.bf16.msra.mxu0 %v2110
    %2823 = vmatpush.bf16.msra.mxu0 %v2108
    %2824 = vmatmul.bf16.gmra.mxu0 %v242
    %v2825 = vpop.f32.mrf.mxu0
    %v2826 = vadd.f32 %v2813, %v2825
    %v2827 = vpop.f32.mrf.mxu0
    %2828 = vdwg.mxu0
    %2829 = vmatpush.bf16.msra.mxu0 %v2138
    %2830 = vmatpush.bf16.msra.mxu0 %v2136
    %2831 = vmatpush.bf16.msra.mxu0 %v2134
    %2832 = vmatpush.bf16.msra.mxu0 %v2132
    %2833 = vmatpush.bf16.msra.mxu0 %v2130
    %2834 = vmatpush.bf16.msra.mxu0 %v2128
    %2835 = vmatpush.bf16.msra.mxu0 %v2126
    %2836 = vmatpush.bf16.msra.mxu0 %v2124
    %2837 = vmatmul.bf16.gmra.mxu0 %v243
    %v2838 = vpop.f32.mrf.mxu0
    %v2839 = vadd.f32 %v2826, %v2838
    %v2840 = vpop.f32.mrf.mxu0
    %2841 = vdwg.mxu0
    %2842 = vmatpush.bf16.msra.mxu0 %v2154
    %2843 = vmatpush.bf16.msra.mxu0 %v2152
    %2844 = vmatpush.bf16.msra.mxu0 %v2150
    %2845 = vmatpush.bf16.msra.mxu0 %v2148
    %2846 = vmatpush.bf16.msra.mxu0 %v2146
    %2847 = vmatpush.bf16.msra.mxu0 %v2144
    %2848 = vmatpush.bf16.msra.mxu0 %v2142
    %2849 = vmatpush.bf16.msra.mxu0 %v2140
    %2850 = vmatmul.bf16.gmra.mxu0 %v244
    %v2851 = vpop.f32.mrf.mxu0
    %v2852 = vadd.f32 %v2839, %v2851
    %v2853 = vpop.f32.mrf.mxu0
    %2854 = vdwg.mxu0
    %2855 = vmatpush.bf16.msra.mxu0 %v2170
    %2856 = vmatpush.bf16.msra.mxu0 %v2168
    %2857 = vmatpush.bf16.msra.mxu0 %v2166
    %2858 = vmatpush.bf16.msra.mxu0 %v2164
    %2859 = vmatpush.bf16.msra.mxu0 %v2162
    %2860 = vmatpush.bf16.msra.mxu0 %v2160
    %2861 = vmatpush.bf16.msra.mxu0 %v2158
    %2862 = vmatpush.bf16.msra.mxu0 %v2156
    %2863 = vmatmul.bf16.gmra.mxu0 %v245
    %v2864 = vpop.f32.mrf.mxu0
    %v2865 = vadd.f32 %v2852, %v2864
    %v2866 = vpop.f32.mrf.mxu0
    %2867 = vdwg.mxu0
    %2868 = vmatpush.bf16.msra.mxu0 %v1803
    %2869 = vmatpush.bf16.msra.mxu0 %v1801
    %2870 = vmatpush.bf16.msra.mxu0 %v1799
    %2871 = vmatpush.bf16.msra.mxu0 %v1797
    %2872 = vmatpush.bf16.msra.mxu0 %v1795
    %2873 = vmatpush.bf16.msra.mxu0 %v1793
    %2874 = vmatpush.bf16.msra.mxu0 %v1791
    %2875 = vmatpush.bf16.msra.mxu0 %v1789
    %2876 = vmatmul.bf16.gmra.mxu0 %v222
    %v2877 = vpop.f32.mrf.mxu0
    %v2878 = vadd.f32 %v633, %v2877
    %v2879 = vpop.f32.mrf.mxu0
    %2880 = vdwg.mxu0
    %2881 = vmatpush.bf16.msra.mxu0 %v1819
    %2882 = vmatpush.bf16.msra.mxu0 %v1817
    %2883 = vmatpush.bf16.msra.mxu0 %v1815
    %2884 = vmatpush.bf16.msra.mxu0 %v1813
    %2885 = vmatpush.bf16.msra.mxu0 %v1811
    %2886 = vmatpush.bf16.msra.mxu0 %v1809
    %2887 = vmatpush.bf16.msra.mxu0 %v1807
    %2888 = vmatpush.bf16.msra.mxu0 %v1805
    %2889 = vmatmul.bf16.gmra.mxu0 %v223
    %v2890 = vpop.f32.mrf.mxu0
    %v2891 = vadd.f32 %v2878, %v2890
    %v2892 = vpop.f32.mrf.mxu0
    %2893 = vdwg.mxu0
    %2894 = vmatpush.bf16.msra.mxu0 %v1835
    %2895 = vmatpush.bf16.msra.mxu0 %v1833
    %2896 = vmatpush.bf16.msra.mxu0 %v1831
    %2897 = vmatpush.bf16.msra.mxu0 %v1829
    %2898 = vmatpush.bf16.msra.mxu0 %v1827
    %2899 = vmatpush.bf16.msra.mxu0 %v1825
    %2900 = vmatpush.bf16.msra.mxu0 %v1823
    %2901 = vmatpush.bf16.msra.mxu0 %v1821
    %2902 = vmatmul.bf16.gmra.mxu0 %v224
    %v2903 = vpop.f32.mrf.mxu0
    %v2904 = vadd.f32 %v2891, %v2903
    %v2905 = vpop.f32.mrf.mxu0
    %2906 = vdwg.mxu0
    %2907 = vmatpush.bf16.msra.mxu0 %v1851
    %2908 = vmatpush.bf16.msra.mxu0 %v1849
    %2909 = vmatpush.bf16.msra.mxu0 %v1847
    %2910 = vmatpush.bf16.msra.mxu0 %v1845
    %2911 = vmatpush.bf16.msra.mxu0 %v1843
    %2912 = vmatpush.bf16.msra.mxu0 %v1841
    %2913 = vmatpush.bf16.msra.mxu0 %v1839
    %2914 = vmatpush.bf16.msra.mxu0 %v1837
    %2915 = vmatmul.bf16.gmra.mxu0 %v225
    %v2916 = vpop.f32.mrf.mxu0
    %v2917 = vadd.f32 %v2904, %v2916
    %v2918 = vpop.f32.mrf.mxu0
    %2919 = vdwg.mxu0
    %2920 = vmatpush.bf16.msra.mxu0 %v1867
    %2921 = vmatpush.bf16.msra.mxu0 %v1865
    %2922 = vmatpush.bf16.msra.mxu0 %v1863
    %2923 = vmatpush.bf16.msra.mxu0 %v1861
    %2924 = vmatpush.bf16.msra.mxu0 %v1859
    %2925 = vmatpush.bf16.msra.mxu0 %v1857
    %2926 = vmatpush.bf16.msra.mxu0 %v1855
    %2927 = vmatpush.bf16.msra.mxu0 %v1853
    %2928 = vmatmul.bf16.gmra.mxu0 %v226
    %v2929 = vpop.f32.mrf.mxu0
    %v2930 = vadd.f32 %v2917, %v2929
    %v2931 = vpop.f32.mrf.mxu0
    %2932 = vdwg.mxu0
    %2933 = vmatpush.bf16.msra.mxu0 %v1883
    %2934 = vmatpush.bf16.msra.mxu0 %v1881
    %2935 = vmatpush.bf16.msra.mxu0 %v1879
    %2936 = vmatpush.bf16.msra.mxu0 %v1877
    %2937 = vmatpush.bf16.msra.mxu0 %v1875
    %2938 = vmatpush.bf16.msra.mxu0 %v1873
    %2939 = vmatpush.bf16.msra.mxu0 %v1871
    %2940 = vmatpush.bf16.msra.mxu0 %v1869
    %2941 = vmatmul.bf16.gmra.mxu0 %v227
    %v2942 = vpop.f32.mrf.mxu0
    %v2943 = vadd.f32 %v2930, %v2942
    %v2944 = vpop.f32.mrf.mxu0
    %2945 = vdwg.mxu0
    %2946 = vmatpush.bf16.msra.mxu0 %v1899
    %2947 = vmatpush.bf16.msra.mxu0 %v1897
    %2948 = vmatpush.bf16.msra.mxu0 %v1895
    %2949 = vmatpush.bf16.msra.mxu0 %v1893
    %2950 = vmatpush.bf16.msra.mxu0 %v1891
    %2951 = vmatpush.bf16.msra.mxu0 %v1889
    %2952 = vmatpush.bf16.msra.mxu0 %v1887
    %2953 = vmatpush.bf16.msra.mxu0 %v1885
    %2954 = vmatmul.bf16.gmra.mxu0 %v228
    %v2955 = vpop.f32.mrf.mxu0
    %v2956 = vadd.f32 %v2943, %v2955
    %v2957 = vpop.f32.mrf.mxu0
    %2958 = vdwg.mxu0
    %2959 = vmatpush.bf16.msra.mxu0 %v1915
    %2960 = vmatpush.bf16.msra.mxu0 %v1913
    %2961 = vmatpush.bf16.msra.mxu0 %v1911
    %2962 = vmatpush.bf16.msra.mxu0 %v1909
    %2963 = vmatpush.bf16.msra.mxu0 %v1907
    %2964 = vmatpush.bf16.msra.mxu0 %v1905
    %2965 = vmatpush.bf16.msra.mxu0 %v1903
    %2966 = vmatpush.bf16.msra.mxu0 %v1901
    %2967 = vmatmul.bf16.gmra.mxu0 %v229
    %v2968 = vpop.f32.mrf.mxu0
    %v2969 = vadd.f32 %v2956, %v2968
    %v2970 = vpop.f32.mrf.mxu0
    %2971 = vdwg.mxu0
    %2972 = vmatpush.bf16.msra.mxu0 %v1931
    %2973 = vmatpush.bf16.msra.mxu0 %v1929
    %2974 = vmatpush.bf16.msra.mxu0 %v1927
    %2975 = vmatpush.bf16.msra.mxu0 %v1925
    %2976 = vmatpush.bf16.msra.mxu0 %v1923
    %2977 = vmatpush.bf16.msra.mxu0 %v1921
    %2978 = vmatpush.bf16.msra.mxu0 %v1919
    %2979 = vmatpush.bf16.msra.mxu0 %v1917
    %2980 = vmatmul.bf16.gmra.mxu0 %v230
    %v2981 = vpop.f32.mrf.mxu0
    %v2982 = vadd.f32 %v2969, %v2981
    %v2983 = vpop.f32.mrf.mxu0
    %2984 = vdwg.mxu0
    %2985 = vmatpush.bf16.msra.mxu0 %v1947
    %2986 = vmatpush.bf16.msra.mxu0 %v1945
    %2987 = vmatpush.bf16.msra.mxu0 %v1943
    %2988 = vmatpush.bf16.msra.mxu0 %v1941
    %2989 = vmatpush.bf16.msra.mxu0 %v1939
    %2990 = vmatpush.bf16.msra.mxu0 %v1937
    %2991 = vmatpush.bf16.msra.mxu0 %v1935
    %2992 = vmatpush.bf16.msra.mxu0 %v1933
    %2993 = vmatmul.bf16.gmra.mxu0 %v231
    %v2994 = vpop.f32.mrf.mxu0
    %v2995 = vadd.f32 %v2982, %v2994
    %v2996 = vpop.f32.mrf.mxu0
    %2997 = vdwg.mxu0
    %2998 = vmatpush.bf16.msra.mxu0 %v1963
    %2999 = vmatpush.bf16.msra.mxu0 %v1961
    %3000 = vmatpush.bf16.msra.mxu0 %v1959
    %3001 = vmatpush.bf16.msra.mxu0 %v1957
    %3002 = vmatpush.bf16.msra.mxu0 %v1955
    %3003 = vmatpush.bf16.msra.mxu0 %v1953
    %3004 = vmatpush.bf16.msra.mxu0 %v1951
    %3005 = vmatpush.bf16.msra.mxu0 %v1949
    %3006 = vmatmul.bf16.gmra.mxu0 %v232
    %v3007 = vpop.f32.mrf.mxu0
    %v3008 = vadd.f32 %v2995, %v3007
    %v3009 = vpop.f32.mrf.mxu0
    %3010 = vdwg.mxu0
    %3011 = vmatpush.bf16.msra.mxu0 %v1979
    %3012 = vmatpush.bf16.msra.mxu0 %v1977
    %3013 = vmatpush.bf16.msra.mxu0 %v1975
    %3014 = vmatpush.bf16.msra.mxu0 %v1973
    %3015 = vmatpush.bf16.msra.mxu0 %v1971
    %3016 = vmatpush.bf16.msra.mxu0 %v1969
    %3017 = vmatpush.bf16.msra.mxu0 %v1967
    %3018 = vmatpush.bf16.msra.mxu0 %v1965
    %3019 = vmatmul.bf16.gmra.mxu0 %v233
    %v3020 = vpop.f32.mrf.mxu0
    %v3021 = vadd.f32 %v3008, %v3020
    %v3022 = vpop.f32.mrf.mxu0
    %3023 = vdwg.mxu0
    %3024 = vmatpush.bf16.msra.mxu0 %v1995
    %3025 = vmatpush.bf16.msra.mxu0 %v1993
    %3026 = vmatpush.bf16.msra.mxu0 %v1991
    %3027 = vmatpush.bf16.msra.mxu0 %v1989
    %3028 = vmatpush.bf16.msra.mxu0 %v1987
    %3029 = vmatpush.bf16.msra.mxu0 %v1985
    %3030 = vmatpush.bf16.msra.mxu0 %v1983
    %3031 = vmatpush.bf16.msra.mxu0 %v1981
    %3032 = vmatmul.bf16.gmra.mxu0 %v234
    %v3033 = vpop.f32.mrf.mxu0
    %v3034 = vadd.f32 %v3021, %v3033
    %v3035 = vpop.f32.mrf.mxu0
    %3036 = vdwg.mxu0
    %3037 = vmatpush.bf16.msra.mxu0 %v2011
    %3038 = vmatpush.bf16.msra.mxu0 %v2009
    %3039 = vmatpush.bf16.msra.mxu0 %v2007
    %3040 = vmatpush.bf16.msra.mxu0 %v2005
    %3041 = vmatpush.bf16.msra.mxu0 %v2003
    %3042 = vmatpush.bf16.msra.mxu0 %v2001
    %3043 = vmatpush.bf16.msra.mxu0 %v1999
    %3044 = vmatpush.bf16.msra.mxu0 %v1997
    %3045 = vmatmul.bf16.gmra.mxu0 %v235
    %v3046 = vpop.f32.mrf.mxu0
    %v3047 = vadd.f32 %v3034, %v3046
    %v3048 = vpop.f32.mrf.mxu0
    %3049 = vdwg.mxu0
    %3050 = vmatpush.bf16.msra.mxu0 %v2027
    %3051 = vmatpush.bf16.msra.mxu0 %v2025
    %3052 = vmatpush.bf16.msra.mxu0 %v2023
    %3053 = vmatpush.bf16.msra.mxu0 %v2021
    %3054 = vmatpush.bf16.msra.mxu0 %v2019
    %3055 = vmatpush.bf16.msra.mxu0 %v2017
    %3056 = vmatpush.bf16.msra.mxu0 %v2015
    %3057 = vmatpush.bf16.msra.mxu0 %v2013
    %3058 = vmatmul.bf16.gmra.mxu0 %v236
    %v3059 = vpop.f32.mrf.mxu0
    %v3060 = vadd.f32 %v3047, %v3059
    %v3061 = vpop.f32.mrf.mxu0
    %3062 = vdwg.mxu0
    %3063 = vmatpush.bf16.msra.mxu0 %v2043
    %3064 = vmatpush.bf16.msra.mxu0 %v2041
    %3065 = vmatpush.bf16.msra.mxu0 %v2039
    %3066 = vmatpush.bf16.msra.mxu0 %v2037
    %3067 = vmatpush.bf16.msra.mxu0 %v2035
    %3068 = vmatpush.bf16.msra.mxu0 %v2033
    %3069 = vmatpush.bf16.msra.mxu0 %v2031
    %3070 = vmatpush.bf16.msra.mxu0 %v2029
    %3071 = vmatmul.bf16.gmra.mxu0 %v237
    %v3072 = vpop.f32.mrf.mxu0
    %v3073 = vadd.f32 %v3060, %v3072
    %v3074 = vpop.f32.mrf.mxu0
    %3075 = vdwg.mxu0
    %3076 = vmatpush.bf16.msra.mxu0 %v2059
    %3077 = vmatpush.bf16.msra.mxu0 %v2057
    %3078 = vmatpush.bf16.msra.mxu0 %v2055
    %3079 = vmatpush.bf16.msra.mxu0 %v2053
    %3080 = vmatpush.bf16.msra.mxu0 %v2051
    %3081 = vmatpush.bf16.msra.mxu0 %v2049
    %3082 = vmatpush.bf16.msra.mxu0 %v2047
    %3083 = vmatpush.bf16.msra.mxu0 %v2045
    %3084 = vmatmul.bf16.gmra.mxu0 %v238
    %v3085 = vpop.f32.mrf.mxu0
    %v3086 = vadd.f32 %v3073, %v3085
    %v3087 = vpop.f32.mrf.mxu0
    %3088 = vdwg.mxu0
    %3089 = vmatpush.bf16.msra.mxu0 %v2075
    %3090 = vmatpush.bf16.msra.mxu0 %v2073
    %3091 = vmatpush.bf16.msra.mxu0 %v2071
    %3092 = vmatpush.bf16.msra.mxu0 %v2069
    %3093 = vmatpush.bf16.msra.mxu0 %v2067
    %3094 = vmatpush.bf16.msra.mxu0 %v2065
    %3095 = vmatpush.bf16.msra.mxu0 %v2063
    %3096 = vmatpush.bf16.msra.mxu0 %v2061
    %3097 = vmatmul.bf16.gmra.mxu0 %v239
    %v3098 = vpop.f32.mrf.mxu0
    %v3099 = vadd.f32 %v3086, %v3098
    %v3100 = vpop.f32.mrf.mxu0
    %3101 = vdwg.mxu0
    %3102 = vmatpush.bf16.msra.mxu0 %v2091
    %3103 = vmatpush.bf16.msra.mxu0 %v2089
    %3104 = vmatpush.bf16.msra.mxu0 %v2087
    %3105 = vmatpush.bf16.msra.mxu0 %v2085
    %3106 = vmatpush.bf16.msra.mxu0 %v2083
    %3107 = vmatpush.bf16.msra.mxu0 %v2081
    %3108 = vmatpush.bf16.msra.mxu0 %v2079
    %3109 = vmatpush.bf16.msra.mxu0 %v2077
    %3110 = vmatmul.bf16.gmra.mxu0 %v240
    %v3111 = vpop.f32.mrf.mxu0
    %v3112 = vadd.f32 %v3099, %v3111
    %v3113 = vpop.f32.mrf.mxu0
    %3114 = vdwg.mxu0
    %3115 = vmatpush.bf16.msra.mxu0 %v2107
    %3116 = vmatpush.bf16.msra.mxu0 %v2105
    %3117 = vmatpush.bf16.msra.mxu0 %v2103
    %3118 = vmatpush.bf16.msra.mxu0 %v2101
    %3119 = vmatpush.bf16.msra.mxu0 %v2099
    %3120 = vmatpush.bf16.msra.mxu0 %v2097
    %3121 = vmatpush.bf16.msra.mxu0 %v2095
    %3122 = vmatpush.bf16.msra.mxu0 %v2093
    %3123 = vmatmul.bf16.gmra.mxu0 %v241
    %v3124 = vpop.f32.mrf.mxu0
    %v3125 = vadd.f32 %v3112, %v3124
    %v3126 = vpop.f32.mrf.mxu0
    %3127 = vdwg.mxu0
    %3128 = vmatpush.bf16.msra.mxu0 %v2123
    %3129 = vmatpush.bf16.msra.mxu0 %v2121
    %3130 = vmatpush.bf16.msra.mxu0 %v2119
    %3131 = vmatpush.bf16.msra.mxu0 %v2117
    %3132 = vmatpush.bf16.msra.mxu0 %v2115
    %3133 = vmatpush.bf16.msra.mxu0 %v2113
    %3134 = vmatpush.bf16.msra.mxu0 %v2111
    %3135 = vmatpush.bf16.msra.mxu0 %v2109
    %3136 = vmatmul.bf16.gmra.mxu0 %v242
    %v3137 = vpop.f32.mrf.mxu0
    %v3138 = vadd.f32 %v3125, %v3137
    %v3139 = vpop.f32.mrf.mxu0
    %3140 = vdwg.mxu0
    %3141 = vmatpush.bf16.msra.mxu0 %v2139
    %3142 = vmatpush.bf16.msra.mxu0 %v2137
    %3143 = vmatpush.bf16.msra.mxu0 %v2135
    %3144 = vmatpush.bf16.msra.mxu0 %v2133
    %3145 = vmatpush.bf16.msra.mxu0 %v2131
    %3146 = vmatpush.bf16.msra.mxu0 %v2129
    %3147 = vmatpush.bf16.msra.mxu0 %v2127
    %3148 = vmatpush.bf16.msra.mxu0 %v2125
    %3149 = vmatmul.bf16.gmra.mxu0 %v243
    %v3150 = vpop.f32.mrf.mxu0
    %v3151 = vadd.f32 %v3138, %v3150
    %v3152 = vpop.f32.mrf.mxu0
    %3153 = vdwg.mxu0
    %3154 = vmatpush.bf16.msra.mxu0 %v2155
    %3155 = vmatpush.bf16.msra.mxu0 %v2153
    %3156 = vmatpush.bf16.msra.mxu0 %v2151
    %3157 = vmatpush.bf16.msra.mxu0 %v2149
    %3158 = vmatpush.bf16.msra.mxu0 %v2147
    %3159 = vmatpush.bf16.msra.mxu0 %v2145
    %3160 = vmatpush.bf16.msra.mxu0 %v2143
    %3161 = vmatpush.bf16.msra.mxu0 %v2141
    %3162 = vmatmul.bf16.gmra.mxu0 %v244
    %v3163 = vpop.f32.mrf.mxu0
    %v3164 = vadd.f32 %v3151, %v3163
    %v3165 = vpop.f32.mrf.mxu0
    %3166 = vdwg.mxu0
    %3167 = vmatpush.bf16.msra.mxu0 %v2171
    %3168 = vmatpush.bf16.msra.mxu0 %v2169
    %3169 = vmatpush.bf16.msra.mxu0 %v2167
    %3170 = vmatpush.bf16.msra.mxu0 %v2165
    %3171 = vmatpush.bf16.msra.mxu0 %v2163
    %3172 = vmatpush.bf16.msra.mxu0 %v2161
    %3173 = vmatpush.bf16.msra.mxu0 %v2159
    %3174 = vmatpush.bf16.msra.mxu0 %v2157
    %3175 = vmatmul.bf16.gmra.mxu0 %v245
    %v3176 = vpop.f32.mrf.mxu0
    %v3177 = vadd.f32 %v3164, %v3176
    %v3178 = vpop.f32.mrf.mxu0
    %3179 = vdwg.mxu0
    %v3180 = vmax.f32 %v2865, 0.0
    %v3181 = vmax.f32 %v3177, 0.0
    %v3182 = vpack.c.bf16 %v3180, %v3180
    %v3183 = vpack.c.bf16 %v3181, %v3181
    %v3184 = vld [vmem:[#allocation8] sm:$0xf]
    %v3185 = vld [vmem:[#allocation8 + $0x4] sm:$0xf]
    %v3186 = vld [vmem:[#allocation8 + $0x8] sm:$0xf]
    %v3187 = vld [vmem:[#allocation8 + $0xc] sm:$0xf]
    %v3188 = vld [vmem:[#allocation8 + $0x10] sm:$0xf]
    %v3189 = vld [vmem:[#allocation8 + $0x14] sm:$0xf]
    %v3190 = vld [vmem:[#allocation8 + $0x18] sm:$0xf]
    %v3191 = vld [vmem:[#allocation8 + $0x1c] sm:$0xf]
    %v3192 = vld [vmem:[#allocation8 + $0x20] sm:$0xf]
    %v3193 = vld [vmem:[#allocation8 + $0x24] sm:$0xf]
    %v3194 = vld [vmem:[#allocation8 + $0x28] sm:$0xf]
    %v3195 = vld [vmem:[#allocation8 + $0x2c] sm:$0xf]
    %v3196 = vld [vmem:[#allocation8 + $0x30] sm:$0xf]
    %v3197 = vld [vmem:[#allocation8 + $0x34] sm:$0xf]
    %v3198 = vld [vmem:[#allocation8 + $0x38] sm:$0xf]
    %v3199 = vld [vmem:[#allocation8 + $0x3c] sm:$0xf]
    %v3200 = vld [vmem:[#allocation8 + $0x40] sm:$0xf]
    %v3201 = vld [vmem:[#allocation8 + $0x44] sm:$0xf]
    %v3202 = vld [vmem:[#allocation8 + $0x48] sm:$0xf]
    %v3203 = vld [vmem:[#allocation8 + $0x4c] sm:$0xf]
    %v3204 = vld [vmem:[#allocation8 + $0x50] sm:$0xf]
    %v3205 = vld [vmem:[#allocation8 + $0x54] sm:$0xf]
    %v3206 = vld [vmem:[#allocation8 + $0x58] sm:$0xf]
    %v3207 = vld [vmem:[#allocation8 + $0x5c] sm:$0xf]
    %v3208 = vld [vmem:[#allocation8 + $0x60] sm:$0xf]
    %v3209 = vld [vmem:[#allocation8 + $0x64] sm:$0xf]
    %v3210 = vld [vmem:[#allocation8 + $0x68] sm:$0xf]
    %v3211 = vld [vmem:[#allocation8 + $0x6c] sm:$0xf]
    %v3212 = vld [vmem:[#allocation8 + $0x70] sm:$0xf]
    %v3213 = vld [vmem:[#allocation8 + $0x74] sm:$0xf]
    %v3214 = vld [vmem:[#allocation8 + $0x78] sm:$0xf]
    %v3215 = vld [vmem:[#allocation8 + $0x7c] sm:$0xf]
    %v3216 = vld [vmem:[#allocation10] sm:$0x1]
    %v3218 = vperm.slane %v3216, 0
    %v3252 = vunpack.c.l.b16 %v3184
    %v3253 = vunpack.c.l.b16 %v3185
    %v3254 = vunpack.c.l.b16 %v3186
    %v3255 = vunpack.c.l.b16 %v3187
    %v3256 = vunpack.c.l.b16 %v3188
    %v3257 = vunpack.c.l.b16 %v3189
    %v3258 = vunpack.c.l.b16 %v3190
    %v3259 = vunpack.c.l.b16 %v3191
    %v3260 = vunpack.c.l.b16 %v3192
    %v3261 = vunpack.c.l.b16 %v3193
    %v3262 = vunpack.c.l.b16 %v3194
    %v3263 = vunpack.c.l.b16 %v3195
    %v3264 = vunpack.c.l.b16 %v3196
    %v3265 = vunpack.c.l.b16 %v3197
    %v3266 = vunpack.c.l.b16 %v3198
    %v3267 = vunpack.c.l.b16 %v3199
    %v3268 = vunpack.c.l.b16 %v3200
    %v3269 = vunpack.c.l.b16 %v3201
    %v3270 = vunpack.c.l.b16 %v3202
    %v3271 = vunpack.c.l.b16 %v3203
    %v3272 = vunpack.c.l.b16 %v3204
    %v3273 = vunpack.c.l.b16 %v3205
    %v3274 = vunpack.c.l.b16 %v3206
    %v3275 = vunpack.c.l.b16 %v3207
    %v3276 = vunpack.c.l.b16 %v3208
    %v3277 = vunpack.c.l.b16 %v3209
    %v3278 = vunpack.c.l.b16 %v3210
    %v3279 = vunpack.c.l.b16 %v3211
    %v3280 = vunpack.c.l.b16 %v3212
    %v3281 = vunpack.c.l.b16 %v3213
    %v3282 = vunpack.c.l.b16 %v3214
    %v3283 = vunpack.c.l.b16 %v3215
    %v3284 = vpack.c.b16 %v3253, %v3252
    %v3285 = vpack.c.b16 %v3255, %v3254
    %v3286 = vpack.c.b16 %v3257, %v3256
    %v3287 = vpack.c.b16 %v3259, %v3258
    %v3288 = vpack.c.b16 %v3261, %v3260
    %v3289 = vpack.c.b16 %v3263, %v3262
    %v3290 = vpack.c.b16 %v3265, %v3264
    %v3291 = vpack.c.b16 %v3267, %v3266
    %v3292 = vpack.c.b16 %v3269, %v3268
    %v3293 = vpack.c.b16 %v3271, %v3270
    %v3294 = vpack.c.b16 %v3273, %v3272
    %v3295 = vpack.c.b16 %v3275, %v3274
    %v3296 = vpack.c.b16 %v3277, %v3276
    %v3297 = vpack.c.b16 %v3279, %v3278
    %v3298 = vpack.c.b16 %v3281, %v3280
    %v3299 = vpack.c.b16 %v3283, %v3282
    %3316 = vmatpush.bf16.msra.mxu0 %v3291
    %3317 = vmatpush.bf16.msra.mxu0 %v3290
    %3318 = vmatpush.bf16.msra.mxu0 %v3289
    %3319 = vmatpush.bf16.msra.mxu0 %v3288
    %3320 = vmatpush.bf16.msra.mxu0 %v3287
    %3321 = vmatpush.bf16.msra.mxu0 %v3286
    %3322 = vmatpush.bf16.msra.mxu0 %v3285
    %3323 = vmatpush.bf16.msra.mxu0 %v3284
    %3324 = vmatmul.bf16.gmra.mxu0 %v3182
    %v3325 = vpop.f32.mrf.mxu0
    %v3326 = vadd.f32 %v3218, %v3325
    %v3327 = vpop.f32.mrf.mxu0
    %3328 = vdwg.mxu0
    %3329 = vmatpush.bf16.msra.mxu0 %v3299
    %3330 = vmatpush.bf16.msra.mxu0 %v3298
    %3331 = vmatpush.bf16.msra.mxu0 %v3297
    %3332 = vmatpush.bf16.msra.mxu0 %v3296
    %3333 = vmatpush.bf16.msra.mxu0 %v3295
    %3334 = vmatpush.bf16.msra.mxu0 %v3294
    %3335 = vmatpush.bf16.msra.mxu0 %v3293
    %3336 = vmatpush.bf16.msra.mxu0 %v3292
    %3337 = vmatmul.bf16.gmra.mxu0 %v3183
    %v3338 = vpop.f32.mrf.mxu0
    %v3339 = vadd.f32 %v3326, %v3338
    %v3340 = vpop.f32.mrf.mxu0
    %3341 = vdwg.mxu0
    %3342 = vst [vmem:[#allocation11] sm:$0xff] %v3339
    // Predicated region
    $region42: #{tpu_custom_call.1} parent=1 // pred_check
      _
    $region43: #{tpu_custom_call.1} parent=1 // pred_check_branch
      %3344 = sbr.rel (0) target = $region45
    $region44: #{tpu_custom_call.1} parent=1 // pred_region
      %3346 = vsyncadd [#allocation4], 96
      %s3347 = sshll.u32 [#allocation11], 4
      %s3348 = int_to_ptr.vmem [resolvable:$true] %s3347
      %s3349 = sshll.u32 %s5, 4
      %s3350 = int_to_ptr.hbm [resolvable:$true] %s3349
      %3355 = dma.vmem_to_hbm [thread:$0]  %s3348, 32, %s3350, [#allocation4], 32, 32, 2
    $region45: #{tpu_custom_call.1} parent=1 // pred_fallthru
      _
    // Predicated region
    $region46: #{tpu_custom_call.1} parent=1 // pred_check
      _
    $region47: #{tpu_custom_call.1} parent=1 // pred_check_branch
      %3357 = sbr.rel (0) target = $region49
    $region48: #{tpu_custom_call.1} parent=1 // pred_region
      %3359 = dma.done [#allocation4], 128
    $region49: #{tpu_custom_call.1} parent=1 // pred_fallthru
      _
    %3360 = vsyncpa [#allocation3], 1
    %3361 = vsyncpa [#allocation6], 1
    %3362 = vsyncpa [#allocation9], 1
    %3363 = vsyncpa [#allocation4], 1

</llo_original>
